<compile_context>
chip_gen: v6e
topology: v6e:2x2x1
jax: 0.10.0
libtpu: 0.0.40
codegen_flags: <defaults>
</compile_context>

<pallas_src>
import jax
import jax.numpy as jnp
from jax import lax
from jax.experimental import pallas as pl
from jax.experimental.pallas import tpu as pltpu


_VMEM_LIMIT = 32 * 1024 * 1024  # safe on v5e/v6e/v7x; tiles below are far smaller


def _round_up(x, m):
    return (x + m - 1) // m * m


# ----------------------------------------------------------------------------
# Kernels
# ----------------------------------------------------------------------------
def _lateral_kernel(x_ref, w_ref, b_ref, o_ref):
    # x_ref: (TM, Cin), w_ref: (Cin, Cout), b_ref: (1, Cout), o_ref: (TM, Cout)
    y = jnp.dot(x_ref[...], w_ref[...], preferred_element_type=jnp.float32)
    o_ref[...] = (y + b_ref[...]).astype(o_ref.dtype)


def _lateral_merge_kernel(x_ref, w_ref, b_ref, up_ref, o_ref):
    # Fused 1x1 conv + top-down residual add (deletes the standalone add
    # kernel and one full HBM read of the merged map).
    y = jnp.dot(x_ref[...], w_ref[...], preferred_element_type=jnp.float32)
    y = y + b_ref[...] + up_ref[...].astype(jnp.float32)
    o_ref[...] = y.astype(o_ref.dtype)


def _smooth_kernel(x_mid_ref, x_top_ref, x_bot_ref, w_ref, b_ref, o_ref,
                   xpad_ref, acc_ref):
    # 3x3 conv (padding=1) on one H-strip of one batch element.
    # x_mid_ref: (1, TH, W, Cin)   rows [t*TH, t*TH+TH)
    # x_top_ref: (1, 1, W, Cin)    row  t*TH-1 (clamped; zeroed when t == 0)
    # x_bot_ref: (1, 1, W, Cin)    row  t*TH+TH (clamped; zeroed on last strip)
    # xpad_ref : VMEM scratch (TH+2, W+2, Cin) zero-halo staging tile
    # acc_ref  : VMEM scratch (TH*W, Cout) f32 accumulator
    t = pl.program_id(1)
    nt = pl.num_programs(1)
    _, TH, W, Cin = x_mid_ref.shape
    Cout = o_ref.shape[3]

    # Stage the zero-padded (TH+2, W+2, Cin) tile in VMEM scratch.
    xpad_ref[1:TH + 1, 1:W + 1, :] = x_mid_ref[0]
    top_mask = (t > 0).astype(xpad_ref.dtype)
    bot_mask = (t < nt - 1).astype(xpad_ref.dtype)
    xpad_ref[0:1, 1:W + 1, :] = x_top_ref[0] * top_mask
    xpad_ref[TH + 1:TH + 2, 1:W + 1, :] = x_bot_ref[0] * bot_mask
    zcol = jnp.zeros((TH + 2, 1, Cin), xpad_ref.dtype)
    xpad_ref[:, 0:1, :] = zcol
    xpad_ref[:, W + 1:W + 2, :] = zcol

    # 9-tap shifted matmul, accumulated in VMEM f32.
    acc_ref[...] = jnp.zeros_like(acc_ref)
    for dy in range(3):
        for dx in range(3):
            patch = xpad_ref[dy:dy + TH, dx:dx + W, :].reshape(TH * W, Cin)
            acc_ref[...] += jnp.dot(patch, w_ref[dy, dx],
                                    preferred_element_type=jnp.float32)
    out = acc_ref[...] + b_ref[...]
    o_ref[0] = out.reshape(TH, W, Cout).astype(o_ref.dtype)


# ----------------------------------------------------------------------------
# Tiling helpers
# ----------------------------------------------------------------------------
def _pick_row_tile(n_rows, bytes_per_row, cap_bytes=4 * 1024 * 1024):
    """Row tile for the lateral matmul: multiple of 8, <= 1024 rows, VMEM-safe."""
    cap = max(8, min(1024, cap_bytes // max(bytes_per_row, 1)))
    cap -= cap % 8
    cap = max(cap, 8)
    if n_rows <= cap:
        return _round_up(n_rows, 8)
    for tm in range(cap, 7, -8):        # prefer a divisor -> no padding needed
        if n_rows % tm == 0:
            return tm
    return cap


def _pick_h_tile(H, W, Cin, Cout, max_rows=None, cap_bytes=2 * 1024 * 1024):
    """Largest divisor of H whose staged strip stays within cap_bytes."""
    per_row = ((W + 2) * Cin + 2 * W * Cout) * 4
    cap = max(1, cap_bytes // max(per_row, 1))
    if max_rows is not None:
        cap = min(cap, max_rows)
    th = min(H, cap)
    while H % th != 0:
        th -= 1
    return th


# ----------------------------------------------------------------------------
# Pallas wrappers (NHWC)
# ----------------------------------------------------------------------------
def lateral_conv_nhwc(x, w, b, up=None):
    """Fused 1x1 conv (+ optional top-down add).

    x: (B,H,W,Cin), w: (Cin,Cout), b: (Cout,), up: (B,H,W,Cout) or None.
    """
    B, H, W, Cin = x.shape
    Cout = w.shape[1]
    R = B * H * W
    bpr = (Cin + Cout + (Cout if up is not None else 0)) * 4
    TM = _pick_row_tile(R, bpr)
    R_pad = _round_up(R, TM)

    x2 = x.reshape(R, Cin)
    if R_pad != R:
        x2 = jnp.pad(x2, ((0, R_pad - R), (0, 0)))

    args = [x2, w, b.reshape(1, Cout)]
    in_specs = [
        pl.BlockSpec((TM, Cin), lambda i: (i, 0)),
        pl.BlockSpec((Cin, Cout), lambda i: (0, 0)),
        pl.BlockSpec((1, Cout), lambda i: (0, 0)),
    ]
    kernel = _lateral_kernel
    if up is not None:
        up2 = up.reshape(R, Cout)
        if R_pad != R:
            up2 = jnp.pad(up2, ((0, R_pad - R), (0, 0)))
        args.append(up2)
        in_specs.append(pl.BlockSpec((TM, Cout), lambda i: (i, 0)))
        kernel = _lateral_merge_kernel

    out = pl.pallas_call(
        kernel,
        out_shape=jax.ShapeDtypeStruct((R_pad, Cout), x.dtype),
        grid=(R_pad // TM,),
        in_specs=in_specs,
        out_specs=pl.BlockSpec((TM, Cout), lambda i: (i, 0)),
        compiler_params=pltpu.CompilerParams(
            dimension_semantics=("parallel",),
            vmem_limit_bytes=_VMEM_LIMIT),
    )(*args)
    return out[:R].reshape(B, H, W, Cout)


def smooth_conv_nhwc(x, w, b, max_rows=None):
    """3x3 conv, padding=1. H-strip tiled, halo handled in-kernel (no jnp.pad).

    x: (B,H,W,Cin), w: (3,3,Cin,Cout) HWIO, b: (Cout,).
    """
    B, H, W, Cin = x.shape
    Cout = w.shape[3]
    TH = _pick_h_tile(H, W, Cin, Cout, max_rows)
    NT = H // TH

    mid_spec = pl.BlockSpec((1, TH, W, Cin), lambda bb, t: (bb, t, 0, 0))
    top_spec = pl.BlockSpec(
        (1, 1, W, Cin), lambda bb, t: (bb, jnp.maximum(t * TH - 1, 0), 0, 0))
    bot_spec = pl.BlockSpec(
        (1, 1, W, Cin), lambda bb, t: (bb, jnp.minimum(t * TH + TH, H - 1), 0, 0))

    return pl.pallas_call(
        _smooth_kernel,
        out_shape=jax.ShapeDtypeStruct((B, H, W, Cout), x.dtype),
        grid=(B, NT),
        in_specs=[
            mid_spec, top_spec, bot_spec,
            pl.BlockSpec((3, 3, Cin, Cout), lambda bb, t: (0, 0, 0, 0)),
            pl.BlockSpec((1, Cout), lambda bb, t: (0, 0)),
        ],
        out_specs=pl.BlockSpec((1, TH, W, Cout), lambda bb, t: (bb, t, 0, 0)),
        scratch_shapes=[
            pltpu.VMEM((TH + 2, W + 2, Cin), x.dtype),
            pltpu.VMEM((TH * W, Cout), jnp.float32),
        ],
        compiler_params=pltpu.CompilerParams(
            dimension_semantics=("parallel", "parallel"),
            vmem_limit_bytes=_VMEM_LIMIT),
    )(x, x, x, w, b.reshape(1, Cout))


def nearest_resize_nhwc(x, Ht, Wt):
    """F.interpolate(mode='nearest') semantics: src = floor(dst * src/dst)."""
    # TODO(synk): kept as XLA gather glue (handles arbitrary up/down resize
    # exactly like PyTorch); the add it feeds is fused into the lateral kernel.
    B, Hs, Ws, C = x.shape
    ri = (jnp.arange(Ht) * Hs) // Ht
    ci = (jnp.arange(Wt) * Ws) // Wt
    return x[:, ri][:, :, ci]


# ----------------------------------------------------------------------------
# FPN forward (NCHW in / NCHW out, matches the PyTorch module)
# ----------------------------------------------------------------------------
def fpn_forward(features_nchw, params, num_levels):
    assert len(features_nchw) == num_levels
    feats = [jnp.transpose(f, (0, 2, 3, 1)) for f in features_nchw]   # -> NHWC

    merged = [None] * num_levels
    top = num_levels - 1
    merged[top] = lateral_conv_nhwc(feats[top], params["lat_w"][top],
                                    params["lat_b"][top])
    for i in range(num_levels - 1, 0, -1):
        Ht, Wt = feats[i - 1].shape[1:3]
        up = nearest_resize_nhwc(merged[i], Ht, Wt)
        merged[i - 1] = lateral_conv_nhwc(
            feats[i - 1], params["lat_w"][i - 1], params["lat_b"][i - 1], up=up)

    outs = [smooth_conv_nhwc(m, params["sm_w"][i], params["sm_b"][i])
            for i, m in enumerate(merged)]
    return [jnp.transpose(o, (0, 3, 1, 2)) for o in outs]             # -> NCHW


# ----------------------------------------------------------------------------
# Pure-JAX reference (for correctness check)
# ----------------------------------------------------------------------------
def fpn_reference(features_nchw, params, num_levels):
    def conv_nhwc(x, w_hwio, b):
        y = lax.conv_general_dilated(
            x, w_hwio, window_strides=(1, 1),
            padding=[((w_hwio.shape[0] - 1) // 2,) * 2] * 2,
            dimension_numbers=("NHWC", "HWIO", "NHWC"))
        return y + b

    feats = [jnp.transpose(f, (0, 2, 3, 1)) for f in features_nchw]
    laterals = [
        conv_nhwc(f, params["lat_w"][i].reshape(1, 1, *params["lat_w"][i].shape),
                  params["lat_b"][i])
        for i, f in enumerate(feats)
    ]
    for i in range(num_levels - 1, 0, -1):
        Ht, Wt = laterals[i - 1].shape[1:3]
        laterals[i - 1] = laterals[i - 1] + nearest_resize_nhwc(laterals[i], Ht, Wt)
    outs = [
        conv_nhwc(l, params["sm_w"][i], params["sm_b"][i])
        for i, l in enumerate(laterals)
    ]
    return [jnp.transpose(o, (0, 3, 1, 2)) for o in outs]


# ----------------------------------------------------------------------------
# Main
# ----------------------------------------------------------------------------
if __name__ == "__main__":
    key = jax.random.PRNGKey(0)

    num_levels = 4
    in_channels = 4
    out_channels = 8
    batch = 2
    # features from lowest to highest resolution (per the module's docstring)
    spatial = [4, 8, 16, 32]

    keys = jax.random.split(key, 1 + 4 * num_levels)
    kiter = iter(keys[1:])

    params = {"lat_w": [], "lat_b": [], "sm_w": [], "sm_b": []}
    for _ in range(num_levels):
        # lateral 1x1: PyTorch (Cout, Cin, 1, 1) -> stored as (Cin, Cout)
        params["lat_w"].append(
            jax.random.normal(next(kiter), (in_channels, out_channels),
                              jnp.float32) * 0.1)
        params["lat_b"].append(
            jax.random.normal(next(kiter), (out_channels,), jnp.float32) * 0.1)
        # smooth 3x3: PyTorch (Cout, Cin, 3, 3) -> stored HWIO (3, 3, Cin, Cout)
        params["sm_w"].append(
            jax.random.normal(next(kiter), (3, 3, out_channels, out_channels),
                              jnp.float32) * 0.1)
        params["sm_b"].append(
            jax.random.normal(next(kiter), (out_channels,), jnp.float32) * 0.1)

    feat_keys = jax.random.split(keys[0], num_levels)
    features = [
        jax.random.normal(feat_keys[i], (batch, in_channels, s, s), jnp.float32)
        for i, s in enumerate(spatial)
    ]

    outs = fpn_forward(features, params, num_levels)
    outs = [jax.block_until_ready(o) for o in outs]

    refs = fpn_reference(features, params, num_levels)
    for o, r in zip(outs, refs):
        assert o.shape == r.shape
        assert jnp.allclose(o, r, atol=1e-4, rtol=1e-4), "mismatch vs reference"

    # Extra check: exercise the multi-strip halo path of the smooth kernel.
    xh = jax.random.normal(jax.random.PRNGKey(7),
                           (batch, 32, 32, out_channels), jnp.float32)
    y_tiled = jax.block_until_ready(
        smooth_conv_nhwc(xh, params["sm_w"][0], params["sm_b"][0], max_rows=8))
    y_ref = lax.conv_general_dilated(
        xh, params["sm_w"][0], window_strides=(1, 1),
        padding=[(1, 1), (1, 1)],
        dimension_numbers=("NHWC", "HWIO", "NHWC")) + params["sm_b"][0]
    assert jnp.allclose(y_tiled, y_ref, atol=1e-4, rtol=1e-4), "halo mismatch"

    print("KERNEL_OK")
</pallas_src>

<mosaic_0001>
module attributes {stable_mosaic.version = 11 : i64} {
  func.func @_lateral_kernel(%arg0: i32, %arg1: memref<1024x4xf32, #tpu.memory_space<vmem>>, %arg2: memref<4x8xf32, #tpu.memory_space<vmem>>, %arg3: memref<1x8xf32, #tpu.memory_space<vmem>>, %arg4: memref<1024x8xf32, #tpu.memory_space<vmem>>) attributes {dimension_semantics = [#tpu.dimension_semantics<parallel>], iteration_bounds = array<i64: 2>, scalar_prefetch = 0 : i64, scratch_operands = 0 : i64, tpu.core_type = #tpu.core_type<tc>, window_params = [{transform_indices = @transform_0, window_bounds = array<i64: 1024, 4>}, {pipeline_mode = #tpu.pipeline_mode<synchronous>, transform_indices = @transform_1, window_bounds = array<i64: 4, 8>}, {pipeline_mode = #tpu.pipeline_mode<synchronous>, transform_indices = @transform_2, window_bounds = array<i64: 1, 8>}, {transform_indices = @transform_3, window_bounds = array<i64: 1024, 8>}]} {
    %c0 = arith.constant 0 : index
    %c0_0 = arith.constant 0 : index
    %0 = vector.load %arg1[%c0, %c0_0] : memref<1024x4xf32, #tpu.memory_space<vmem>>, vector<1024x4xf32>
    %c0_1 = arith.constant 0 : index
    %c0_2 = arith.constant 0 : index
    %1 = vector.load %arg2[%c0_1, %c0_2] : memref<4x8xf32, #tpu.memory_space<vmem>>, vector<4x8xf32>
    %cst = arith.constant dense<0.000000e+00> : vector<1024x8xf32>
    %2 = tpu.matmul %0, %1, %cst {dimension_numbers = #tpu.dot_dimension_numbers<[1], [0], [0], [1], [0, 0, 1, 1], [], []>} : vector<1024x4xf32>, vector<4x8xf32>, vector<1024x8xf32> -> vector<1024x8xf32>
    %c0_3 = arith.constant 0 : index
    %c0_4 = arith.constant 0 : index
    %3 = vector.load %arg3[%c0_3, %c0_4] : memref<1x8xf32, #tpu.memory_space<vmem>>, vector<1x8xf32>
    %4 = vector.broadcast %3 : vector<1x8xf32> to vector<1024x8xf32>
    %5 = arith.addf %2, %4 : vector<1024x8xf32>
    %c0_5 = arith.constant 0 : index
    %c0_6 = arith.constant 0 : index
    %6 = vector.load %arg4[%c0_5, %c0_6] : memref<1024x8xf32, #tpu.memory_space<vmem>>, vector<1024x8xf32>
    tpu.vector_store %arg4[%c0_5, %c0_6], %5 {strides = array<i32>} : memref<1024x8xf32, #tpu.memory_space<vmem>>, vector<1024x8xf32>,
    return
  }
  func.func @transform_0(%arg0: i32) -> (i32, i32) {
    %c0_i32 = arith.constant 0 : i32
    %c0_i32_0 = arith.constant 0 : i32
    return %arg0, %c0_i32 : i32, i32
  }
  func.func @transform_1(%arg0: i32) -> (i32, i32) {
    %c0_i32 = arith.constant 0 : i32
    %c0_i32_0 = arith.constant 0 : i32
    %c0_i32_1 = arith.constant 0 : i32
    return %c0_i32, %c0_i32_0 : i32, i32
  }
  func.func @transform_2(%arg0: i32) -> (i32, i32) {
    %c0_i32 = arith.constant 0 : i32
    %c0_i32_0 = arith.constant 0 : i32
    %c0_i32_1 = arith.constant 0 : i32
    return %c0_i32, %c0_i32_0 : i32, i32
  }
  func.func @transform_3(%arg0: i32) -> (i32, i32) {
    %c0_i32 = arith.constant 0 : i32
    %c0_i32_0 = arith.constant 0 : i32
    return %arg0, %c0_i32 : i32, i32
  }
}

</mosaic_0001>

<llo_original>
// kernel: tpu_custom_call.1
$region0: #{tpu_custom_call.1}
  #allocation0 [shape = 'u32[]', space=smem, size = 0x4, offset = 0x4, fixed_abs, tag = 'smem constant byte address 0x4 - core index']
  #allocation1 [shape = 'u32[144,128]{1,0:T(1,128)}', space=vmem, size = 0x12000, scoped, tag = 'internal scratch']
  %s0 = inlined_call_operand.vmem [shape: f32[2048,4], index: 0, kind: input, shape index: {}]
  %s1 = inlined_call_operand.vmem [shape: f32[4,8], index: 1, kind: input, shape index: {}]
  %s2 = inlined_call_operand.vmem [shape: f32[1,8], index: 2, kind: input, shape index: {}]
  %s3 = inlined_call_operand.vmem [shape: f32[2048,8], index: 3, kind: output, shape index: {}]
  %s4 = sld [smem:[#allocation0]]
  $region45: #{tpu_custom_call.1} parent=0
    _
  %s6 = ssub.s32 1, %s4
  %s7 = scalar_select 0, %s6, %s4
  loop: start=0, step=1, limit=4
  $region2: #{tpu_custom_call.1} parent=0 // loop_pre_header
    _
  $region3: #{tpu_custom_call.1} parent=0 // loop_header
    %s9 = sphi 0, %s13
    %p10 = scmp.ge.s32.totalorder %s9, 4
    %s19 = sphi 0, %s21
    %s22 = sphi 0, %s19
    %s23 = sphi 0, %s22
    %s39 = sphi 0, %s23
    %s43 = sphi 0, %s43
    %s45 = sphi 0, %s43
    %s46 = sphi 0, %s45
    %s60 = sphi 0, %s46
    %s64 = sphi 0, %s64
    %s66 = sphi 0, %s64
    %s67 = sphi 0, %s66
    %s81 = sphi 0, %s67
    %s87 = sphi 0, %s89
    %s90 = sphi 0, %s87
    %s91 = sphi 0, %s90
    %s107 = sphi 0, %s91
  $region4: #{tpu_custom_call.1} parent=0 // loop_header_branch
    %12 = sbr.rel (%p10) target = $region8
  $region5: #{tpu_custom_call.1} parent=0 // loop_body
    %s14 = ssub.s32 %s9, 1
    %s15 = ssub.s32 %s9, 2
    %s16 = sadd.s32 %s9, 1
    %s17 = ssub.s32 %s9, %s16
    %p18 = scmp.eq.s32.totalorder %s17, 0
    %s20 = sadd.s32 %s19, 1
    %s21 = scalar_select %p18, %s19, %s20
    %p24 = pneg %p18
    %p25 = scmp.eq.s32.totalorder %s9, 1
    %p26 = por %p24, %p25
    %p27 = scmp.ne.s32.totalorder %s19, %s22
    %p28 = scmp.eq.s32.totalorder %s9, 0
    %p29 = por %p27, %p28
    %p30 = scmp.ne.s32.totalorder %s19, %s22
    %p31 = scmp.eq.s32.totalorder %s14, 1
    %p32 = por %p30, %p31
    %p33 = scmp.ne.s32.totalorder %s22, %s23
    %p34 = scmp.eq.s32.totalorder %s14, 0
    %p35 = por %p33, %p34
    %p36 = scmp.ne.s32.totalorder %s22, %s23
    %p37 = scmp.eq.s32.totalorder %s15, 1
    %p38 = por %p36, %p37
    %p40 = scmp.ne.s32.totalorder %s23, %s39
    %p41 = scmp.eq.s32.totalorder %s15, 0
    %p42 = por %p40, %p41
    %s44 = sadd.s32 %s43, 1
    %p47 = scmp.eq.s32.totalorder %s9, 1
    %p48 = scmp.ne.s32.totalorder %s43, %s45
    %p49 = scmp.eq.s32.totalorder %s9, 0
    %p50 = por %p48, %p49
    %p51 = scmp.ne.s32.totalorder %s43, %s45
    %p52 = scmp.eq.s32.totalorder %s14, 1
    %p53 = por %p51, %p52
    %p54 = scmp.ne.s32.totalorder %s45, %s46
    %p55 = scmp.eq.s32.totalorder %s14, 0
    %p56 = por %p54, %p55
    %p57 = scmp.ne.s32.totalorder %s45, %s46
    %p58 = scmp.eq.s32.totalorder %s15, 1
    %p59 = por %p57, %p58
    %p61 = scmp.ne.s32.totalorder %s46, %s60
    %p62 = scmp.eq.s32.totalorder %s15, 0
    %p63 = por %p61, %p62
    %s65 = sadd.s32 %s64, 1
    %p68 = scmp.eq.s32.totalorder %s9, 1
    %p69 = scmp.ne.s32.totalorder %s64, %s66
    %p70 = scmp.eq.s32.totalorder %s9, 0
    %p71 = por %p69, %p70
    %p72 = scmp.ne.s32.totalorder %s64, %s66
    %p73 = scmp.eq.s32.totalorder %s14, 1
    %p74 = por %p72, %p73
    %p75 = scmp.ne.s32.totalorder %s66, %s67
    %p76 = scmp.eq.s32.totalorder %s14, 0
    %p77 = por %p75, %p76
    %p78 = scmp.ne.s32.totalorder %s66, %s67
    %p79 = scmp.eq.s32.totalorder %s15, 1
    %p80 = por %p78, %p79
    %p82 = scmp.ne.s32.totalorder %s67, %s81
    %p83 = scmp.eq.s32.totalorder %s15, 0
    %p84 = por %p82, %p83
    %s85 = ssub.s32 %s9, %s16
    %p86 = scmp.eq.s32.totalorder %s85, 0
    %s88 = sadd.s32 %s87, 1
    %s89 = scalar_select %p86, %s87, %s88
    %p92 = pneg %p86
    %p93 = scmp.eq.s32.totalorder %s9, 1
    %p94 = por %p92, %p93
    %p95 = scmp.ne.s32.totalorder %s87, %s90
    %p96 = scmp.eq.s32.totalorder %s9, 0
    %p97 = por %p95, %p96
    %p98 = scmp.ne.s32.totalorder %s87, %s90
    %p99 = scmp.eq.s32.totalorder %s14, 1
    %p100 = por %p98, %p99
    %p101 = scmp.ne.s32.totalorder %s90, %s91
    %p102 = scmp.eq.s32.totalorder %s14, 0
    %p103 = por %p101, %p102
    %p104 = scmp.ne.s32.totalorder %s90, %s91
    %p105 = scmp.eq.s32.totalorder %s15, 1
    %p106 = por %p104, %p105
    %p108 = scmp.ne.s32.totalorder %s91, %s107
    %p109 = scmp.eq.s32.totalorder %s15, 0
    %p110 = por %p108, %p109
    %p111 = scmp.le.s32.totalorder 1, %s9
    %p112 = scmp.lt.s32.totalorder %s9, 3
    %p113 = pnand %p111, %p112
    %p114 = pneg %p113
    // Predicated region
    $region9: #{tpu_custom_call.1} parent=5 // pred_check
      _
    $region10: #{tpu_custom_call.1} parent=5 // pred_check_branch
      %116 = sbr.rel (%p113) target = $region12
    $region11: #{tpu_custom_call.1} parent=5 // pred_region
      %s117 = ssub.s32 %s9, 1
      // Predicated region
      $region13: #{tpu_custom_call.1} parent=11 // pred_check
        %p118 = pneg %p56
      $region14: #{tpu_custom_call.1} parent=11 // pred_check_branch
        %120 = sbr.rel (%p118) target = $region16
      $region15: #{tpu_custom_call.1} parent=11 // pred_region
        _
      $region16: #{tpu_custom_call.1} parent=11 // pred_fallthru
        _
      // Predicated region
      $region17: #{tpu_custom_call.1} parent=11 // pred_check
        %p121 = pneg %p77
      $region18: #{tpu_custom_call.1} parent=11 // pred_check_branch
        %123 = sbr.rel (%p121) target = $region20
      $region19: #{tpu_custom_call.1} parent=11 // pred_region
        _
      $region20: #{tpu_custom_call.1} parent=11 // pred_fallthru
        _
    $region12: #{tpu_custom_call.1} parent=5 // pred_fallthru
      _
    %p124 = scmp.lt.s32.totalorder %s9, 2
    // Predicated region
    $region21: #{tpu_custom_call.1} parent=5 // pred_check
      %p125 = pneg %p124
    $region22: #{tpu_custom_call.1} parent=5 // pred_check_branch
      %127 = sbr.rel (%p125) target = $region24
    $region23: #{tpu_custom_call.1} parent=5 // pred_region
      // Predicated region
      $region25: #{tpu_custom_call.1} parent=23 // pred_check
        %p128 = pneg %p29
      $region26: #{tpu_custom_call.1} parent=23 // pred_check_branch
        %130 = sbr.rel (%p128) target = $region28
      $region27: #{tpu_custom_call.1} parent=23 // pred_region
        %s131 = smul.u32 128, %s9
        %p132 = scmp.lt.s32.totalorder %s131, 255
        %s133 = scalar_select %p132, %s131, 255
        %s134 = smul.addr %s133, 8
        %s135 = scalar_lea.vmem %s0, %s134
        %s136 = smul.u32 128, %s9
      $region28: #{tpu_custom_call.1} parent=23 // pred_fallthru
        _
    $region24: #{tpu_custom_call.1} parent=5 // pred_fallthru
      _
    %p137 = scmp.le.s32.totalorder 1, %s9
    %p138 = scmp.lt.s32.totalorder %s9, 3
    %p139 = pnand %p137, %p138
    %p140 = pneg %p139
    // Predicated region
    $region29: #{tpu_custom_call.1} parent=5 // pred_check
      _
    $region30: #{tpu_custom_call.1} parent=5 // pred_check_branch
      %142 = sbr.rel (%p139) target = $region32
    $region31: #{tpu_custom_call.1} parent=5 // pred_region
      %s143 = ssub.s32 %s9, 1
      %s144 = smul.u32 128, %s14
      %p145 = scmp.lt.s32.totalorder %s144, 255
      %s146 = scalar_select %p145, %s144, 255
      %s147 = smul.addr %s146, 8
      %s148 = scalar_lea.vmem %s0, %s147
      %p149 = pneg %p35
      %p150 = pneg %p32
      %p151 = pneg %p56
      %p152 = pneg %p53
      %p153 = pneg %p77
      %p154 = pneg %p74
      %p155 = pneg %p103
      %p156 = pneg %p100
      %s157 = smul.u32 128, %s14
      %p158 = scmp.lt.s32.totalorder %s157, 255
      %s159 = scalar_select %p158, %s157, 255
      %s160 = smul.addr %s159, 8
      %s161 = scalar_lea.vmem %s3, %s160
      %s162 = smul.u32 128, %s14
      %p163 = scmp.lt.s32.totalorder %s162, 255
      %s164 = scalar_select %p163, %s162, 255
      %s165 = smul.addr %s164, 8
      %s166 = scalar_lea.vmem %s0, %s165
      %s167 = smul.u32 128, %s14
      %s168 = smul.u32 128, %s14
      %p169 = scmp.lt.s32.totalorder %s168, 255
      %s170 = scalar_select %p169, %s168, 255
      %s171 = smul.addr %s170, 8
      %s172 = scalar_lea.vmem %s3, %s171
      %s173 = smul.u32 128, %s14
      %v174 = vld [vmem:[%s166] sm:$0xff]
      %v175 = vld [vmem:[%s166 + $0x8] sm:$0xff]
      %v176 = vld [vmem:[%s166 + $0x10] sm:$0xff]
      %v177 = vld [vmem:[%s166 + $0x18] sm:$0xff]
      %v178 = vld [vmem:[%s166 + $0x20] sm:$0xff]
      %v179 = vld [vmem:[%s166 + $0x28] sm:$0xff]
      %v180 = vld [vmem:[%s166 + $0x30] sm:$0xff]
      %v181 = vld [vmem:[%s166 + $0x38] sm:$0xff]
      %v182 = vld [vmem:[%s166 + $0x40] sm:$0xff]
      %v183 = vld [vmem:[%s166 + $0x48] sm:$0xff]
      %v184 = vld [vmem:[%s166 + $0x50] sm:$0xff]
      %v185 = vld [vmem:[%s166 + $0x58] sm:$0xff]
      %v186 = vld [vmem:[%s166 + $0x60] sm:$0xff]
      %v187 = vld [vmem:[%s166 + $0x68] sm:$0xff]
      %v188 = vld [vmem:[%s166 + $0x70] sm:$0xff]
      %v189 = vld [vmem:[%s166 + $0x78] sm:$0xff]
      %v190 = vld [vmem:[%s166 + $0x80] sm:$0xff]
      %v191 = vld [vmem:[%s166 + $0x88] sm:$0xff]
      %v192 = vld [vmem:[%s166 + $0x90] sm:$0xff]
      %v193 = vld [vmem:[%s166 + $0x98] sm:$0xff]
      %v194 = vld [vmem:[%s166 + $0xa0] sm:$0xff]
      %v195 = vld [vmem:[%s166 + $0xa8] sm:$0xff]
      %v196 = vld [vmem:[%s166 + $0xb0] sm:$0xff]
      %v197 = vld [vmem:[%s166 + $0xb8] sm:$0xff]
      %v198 = vld [vmem:[%s166 + $0xc0] sm:$0xff]
      %v199 = vld [vmem:[%s166 + $0xc8] sm:$0xff]
      %v200 = vld [vmem:[%s166 + $0xd0] sm:$0xff]
      %v201 = vld [vmem:[%s166 + $0xd8] sm:$0xff]
      %v202 = vld [vmem:[%s166 + $0xe0] sm:$0xff]
      %v203 = vld [vmem:[%s166 + $0xe8] sm:$0xff]
      %v204 = vld [vmem:[%s166 + $0xf0] sm:$0xff]
      %v205 = vld [vmem:[%s166 + $0xf8] sm:$0xff]
      %v206 = vld [vmem:[%s166 + $0x100] sm:$0xff]
      %v207 = vld [vmem:[%s166 + $0x108] sm:$0xff]
      %v208 = vld [vmem:[%s166 + $0x110] sm:$0xff]
      %v209 = vld [vmem:[%s166 + $0x118] sm:$0xff]
      %v210 = vld [vmem:[%s166 + $0x120] sm:$0xff]
      %v211 = vld [vmem:[%s166 + $0x128] sm:$0xff]
      %v212 = vld [vmem:[%s166 + $0x130] sm:$0xff]
      %v213 = vld [vmem:[%s166 + $0x138] sm:$0xff]
      %v214 = vld [vmem:[%s166 + $0x140] sm:$0xff]
      %v215 = vld [vmem:[%s166 + $0x148] sm:$0xff]
      %v216 = vld [vmem:[%s166 + $0x150] sm:$0xff]
      %v217 = vld [vmem:[%s166 + $0x158] sm:$0xff]
      %v218 = vld [vmem:[%s166 + $0x160] sm:$0xff]
      %v219 = vld [vmem:[%s166 + $0x168] sm:$0xff]
      %v220 = vld [vmem:[%s166 + $0x170] sm:$0xff]
      %v221 = vld [vmem:[%s166 + $0x178] sm:$0xff]
      %v222 = vld [vmem:[%s166 + $0x180] sm:$0xff]
      %v223 = vld [vmem:[%s166 + $0x188] sm:$0xff]
      %v224 = vld [vmem:[%s166 + $0x190] sm:$0xff]
      %v225 = vld [vmem:[%s166 + $0x198] sm:$0xff]
      %v226 = vld [vmem:[%s166 + $0x1a0] sm:$0xff]
      %v227 = vld [vmem:[%s166 + $0x1a8] sm:$0xff]
      %v228 = vld [vmem:[%s166 + $0x1b0] sm:$0xff]
      %v229 = vld [vmem:[%s166 + $0x1b8] sm:$0xff]
      %v230 = vld [vmem:[%s166 + $0x1c0] sm:$0xff]
      %v231 = vld [vmem:[%s166 + $0x1c8] sm:$0xff]
      %v232 = vld [vmem:[%s166 + $0x1d0] sm:$0xff]
      %v233 = vld [vmem:[%s166 + $0x1d8] sm:$0xff]
      %v234 = vld [vmem:[%s166 + $0x1e0] sm:$0xff]
      %v235 = vld [vmem:[%s166 + $0x1e8] sm:$0xff]
      %v236 = vld [vmem:[%s166 + $0x1f0] sm:$0xff]
      %v237 = vld [vmem:[%s166 + $0x1f8] sm:$0xff]
      %v238 = vld [vmem:[%s166 + $0x200] sm:$0xff]
      %v239 = vld [vmem:[%s166 + $0x208] sm:$0xff]
      %v240 = vld [vmem:[%s166 + $0x210] sm:$0xff]
      %v241 = vld [vmem:[%s166 + $0x218] sm:$0xff]
      %v242 = vld [vmem:[%s166 + $0x220] sm:$0xff]
      %v243 = vld [vmem:[%s166 + $0x228] sm:$0xff]
      %v244 = vld [vmem:[%s166 + $0x230] sm:$0xff]
      %v245 = vld [vmem:[%s166 + $0x238] sm:$0xff]
      %v246 = vld [vmem:[%s166 + $0x240] sm:$0xff]
      %v247 = vld [vmem:[%s166 + $0x248] sm:$0xff]
      %v248 = vld [vmem:[%s166 + $0x250] sm:$0xff]
      %v249 = vld [vmem:[%s166 + $0x258] sm:$0xff]
      %v250 = vld [vmem:[%s166 + $0x260] sm:$0xff]
      %v251 = vld [vmem:[%s166 + $0x268] sm:$0xff]
      %v252 = vld [vmem:[%s166 + $0x270] sm:$0xff]
      %v253 = vld [vmem:[%s166 + $0x278] sm:$0xff]
      %v254 = vld [vmem:[%s166 + $0x280] sm:$0xff]
      %v255 = vld [vmem:[%s166 + $0x288] sm:$0xff]
      %v256 = vld [vmem:[%s166 + $0x290] sm:$0xff]
      %v257 = vld [vmem:[%s166 + $0x298] sm:$0xff]
      %v258 = vld [vmem:[%s166 + $0x2a0] sm:$0xff]
      %v259 = vld [vmem:[%s166 + $0x2a8] sm:$0xff]
      %v260 = vld [vmem:[%s166 + $0x2b0] sm:$0xff]
      %v261 = vld [vmem:[%s166 + $0x2b8] sm:$0xff]
      %v262 = vld [vmem:[%s166 + $0x2c0] sm:$0xff]
      %v263 = vld [vmem:[%s166 + $0x2c8] sm:$0xff]
      %v264 = vld [vmem:[%s166 + $0x2d0] sm:$0xff]
      %v265 = vld [vmem:[%s166 + $0x2d8] sm:$0xff]
      %v266 = vld [vmem:[%s166 + $0x2e0] sm:$0xff]
      %v267 = vld [vmem:[%s166 + $0x2e8] sm:$0xff]
      %v268 = vld [vmem:[%s166 + $0x2f0] sm:$0xff]
      %v269 = vld [vmem:[%s166 + $0x2f8] sm:$0xff]
      %v270 = vld [vmem:[%s166 + $0x300] sm:$0xff]
      %v271 = vld [vmem:[%s166 + $0x308] sm:$0xff]
      %v272 = vld [vmem:[%s166 + $0x310] sm:$0xff]
      %v273 = vld [vmem:[%s166 + $0x318] sm:$0xff]
      %v274 = vld [vmem:[%s166 + $0x320] sm:$0xff]
      %v275 = vld [vmem:[%s166 + $0x328] sm:$0xff]
      %v276 = vld [vmem:[%s166 + $0x330] sm:$0xff]
      %v277 = vld [vmem:[%s166 + $0x338] sm:$0xff]
      %v278 = vld [vmem:[%s166 + $0x340] sm:$0xff]
      %v279 = vld [vmem:[%s166 + $0x348] sm:$0xff]
      %v280 = vld [vmem:[%s166 + $0x350] sm:$0xff]
      %v281 = vld [vmem:[%s166 + $0x358] sm:$0xff]
      %v282 = vld [vmem:[%s166 + $0x360] sm:$0xff]
      %v283 = vld [vmem:[%s166 + $0x368] sm:$0xff]
      %v284 = vld [vmem:[%s166 + $0x370] sm:$0xff]
      %v285 = vld [vmem:[%s166 + $0x378] sm:$0xff]
      %v286 = vld [vmem:[%s166 + $0x380] sm:$0xff]
      %v287 = vld [vmem:[%s166 + $0x388] sm:$0xff]
      %v288 = vld [vmem:[%s166 + $0x390] sm:$0xff]
      %v289 = vld [vmem:[%s166 + $0x398] sm:$0xff]
      %v290 = vld [vmem:[%s166 + $0x3a0] sm:$0xff]
      %v291 = vld [vmem:[%s166 + $0x3a8] sm:$0xff]
      %v292 = vld [vmem:[%s166 + $0x3b0] sm:$0xff]
      %v293 = vld [vmem:[%s166 + $0x3b8] sm:$0xff]
      %v294 = vld [vmem:[%s166 + $0x3c0] sm:$0xff]
      %v295 = vld [vmem:[%s166 + $0x3c8] sm:$0xff]
      %v296 = vld [vmem:[%s166 + $0x3d0] sm:$0xff]
      %v297 = vld [vmem:[%s166 + $0x3d8] sm:$0xff]
      %v298 = vld [vmem:[%s166 + $0x3e0] sm:$0xff]
      %v299 = vld [vmem:[%s166 + $0x3e8] sm:$0xff]
      %v300 = vld [vmem:[%s166 + $0x3f0] sm:$0xff]
      %v301 = vld [vmem:[%s166 + $0x3f8] sm:$0xff]
      %v302 = vld [vmem:[%s1] sm:$0xf]
      %v303 = vld [vmem:[%s2] sm:$0x1]
      %v305 = vlaneseq
      %v306 = vshrl.u32 %v305, 7
      %v307 = vsub.s32 0, %v306
      %v308 = vrot.slane %v303, %v307
      %vm310 = vcmask 31744
      %v312 = vsel %vm310, %v174, 0
      %v315 = vsel %vm310, %v175, 0
      %v318 = vsel %vm310, %v176, 0
      %v321 = vsel %vm310, %v177, 0
      %v324 = vsel %vm310, %v178, 0
      %v327 = vsel %vm310, %v179, 0
      %v330 = vsel %vm310, %v180, 0
      %v333 = vsel %vm310, %v181, 0
      %v336 = vsel %vm310, %v182, 0
      %v339 = vsel %vm310, %v183, 0
      %v342 = vsel %vm310, %v184, 0
      %v345 = vsel %vm310, %v185, 0
      %v348 = vsel %vm310, %v186, 0
      %v351 = vsel %vm310, %v187, 0
      %v354 = vsel %vm310, %v188, 0
      %v357 = vsel %vm310, %v189, 0
      %v360 = vsel %vm310, %v190, 0
      %v363 = vsel %vm310, %v191, 0
      %v366 = vsel %vm310, %v192, 0
      %v369 = vsel %vm310, %v193, 0
      %v372 = vsel %vm310, %v194, 0
      %v375 = vsel %vm310, %v195, 0
      %v378 = vsel %vm310, %v196, 0
      %v381 = vsel %vm310, %v197, 0
      %v384 = vsel %vm310, %v198, 0
      %v387 = vsel %vm310, %v199, 0
      %v390 = vsel %vm310, %v200, 0
      %v393 = vsel %vm310, %v201, 0
      %v396 = vsel %vm310, %v202, 0
      %v399 = vsel %vm310, %v203, 0
      %v402 = vsel %vm310, %v204, 0
      %v405 = vsel %vm310, %v205, 0
      %v408 = vsel %vm310, %v206, 0
      %v411 = vsel %vm310, %v207, 0
      %v414 = vsel %vm310, %v208, 0
      %v417 = vsel %vm310, %v209, 0
      %v420 = vsel %vm310, %v210, 0
      %v423 = vsel %vm310, %v211, 0
      %v426 = vsel %vm310, %v212, 0
      %v429 = vsel %vm310, %v213, 0
      %v432 = vsel %vm310, %v214, 0
      %v435 = vsel %vm310, %v215, 0
      %v438 = vsel %vm310, %v216, 0
      %v441 = vsel %vm310, %v217, 0
      %v444 = vsel %vm310, %v218, 0
      %v447 = vsel %vm310, %v219, 0
      %v450 = vsel %vm310, %v220, 0
      %v453 = vsel %vm310, %v221, 0
      %v456 = vsel %vm310, %v222, 0
      %v459 = vsel %vm310, %v223, 0
      %v462 = vsel %vm310, %v224, 0
      %v465 = vsel %vm310, %v225, 0
      %v468 = vsel %vm310, %v226, 0
      %v471 = vsel %vm310, %v227, 0
      %v474 = vsel %vm310, %v228, 0
      %v477 = vsel %vm310, %v229, 0
      %v480 = vsel %vm310, %v230, 0
      %v483 = vsel %vm310, %v231, 0
      %v486 = vsel %vm310, %v232, 0
      %v489 = vsel %vm310, %v233, 0
      %v492 = vsel %vm310, %v234, 0
      %v495 = vsel %vm310, %v235, 0
      %v498 = vsel %vm310, %v236, 0
      %v501 = vsel %vm310, %v237, 0
      %v504 = vsel %vm310, %v238, 0
      %v507 = vsel %vm310, %v239, 0
      %v510 = vsel %vm310, %v240, 0
      %v513 = vsel %vm310, %v241, 0
      %v516 = vsel %vm310, %v242, 0
      %v519 = vsel %vm310, %v243, 0
      %v522 = vsel %vm310, %v244, 0
      %v525 = vsel %vm310, %v245, 0
      %v528 = vsel %vm310, %v246, 0
      %v531 = vsel %vm310, %v247, 0
      %v534 = vsel %vm310, %v248, 0
      %v537 = vsel %vm310, %v249, 0
      %v540 = vsel %vm310, %v250, 0
      %v543 = vsel %vm310, %v251, 0
      %v546 = vsel %vm310, %v252, 0
      %v549 = vsel %vm310, %v253, 0
      %v552 = vsel %vm310, %v254, 0
      %v555 = vsel %vm310, %v255, 0
      %v558 = vsel %vm310, %v256, 0
      %v561 = vsel %vm310, %v257, 0
      %v564 = vsel %vm310, %v258, 0
      %v567 = vsel %vm310, %v259, 0
      %v570 = vsel %vm310, %v260, 0
      %v573 = vsel %vm310, %v261, 0
      %v576 = vsel %vm310, %v262, 0
      %v579 = vsel %vm310, %v263, 0
      %v582 = vsel %vm310, %v264, 0
      %v585 = vsel %vm310, %v265, 0
      %v588 = vsel %vm310, %v266, 0
      %v591 = vsel %vm310, %v267, 0
      %v594 = vsel %vm310, %v268, 0
      %v597 = vsel %vm310, %v269, 0
      %v600 = vsel %vm310, %v270, 0
      %v603 = vsel %vm310, %v271, 0
      %v606 = vsel %vm310, %v272, 0
      %v609 = vsel %vm310, %v273, 0
      %v612 = vsel %vm310, %v274, 0
      %v615 = vsel %vm310, %v275, 0
      %v618 = vsel %vm310, %v276, 0
      %v621 = vsel %vm310, %v277, 0
      %v624 = vsel %vm310, %v278, 0
      %v627 = vsel %vm310, %v279, 0
      %v630 = vsel %vm310, %v280, 0
      %v633 = vsel %vm310, %v281, 0
      %v636 = vsel %vm310, %v282, 0
      %v639 = vsel %vm310, %v283, 0
      %v642 = vsel %vm310, %v284, 0
      %v645 = vsel %vm310, %v285, 0
      %v648 = vsel %vm310, %v286, 0
      %v651 = vsel %vm310, %v287, 0
      %v654 = vsel %vm310, %v288, 0
      %v657 = vsel %vm310, %v289, 0
      %v660 = vsel %vm310, %v290, 0
      %v663 = vsel %vm310, %v291, 0
      %v666 = vsel %vm310, %v292, 0
      %v669 = vsel %vm310, %v293, 0
      %v672 = vsel %vm310, %v294, 0
      %v675 = vsel %vm310, %v295, 0
      %v678 = vsel %vm310, %v296, 0
      %v681 = vsel %vm310, %v297, 0
      %v684 = vsel %vm310, %v298, 0
      %v687 = vsel %vm310, %v299, 0
      %v690 = vsel %vm310, %v300, 0
      %v693 = vsel %vm310, %v301, 0
      %vm695 = vcmask 1043456
      %v697 = vsel %vm695, %v302, 0
      %699 = vmatprep.subr.mxu0 0.0
      %700 = vmatpush1.msra.mxu0 0.0
      %701 = vmatprep.subr.mxu0 0.0
      %702 = vmatpush1.msra.mxu0 0.0
      %703 = vmatprep.subr.mxu0 0.0
      %704 = vmatpush1.msra.mxu0 0.0
      %705 = vmatprep.subr.mxu0 0.0
      %706 = vmatpush1.msra.mxu0 0.0
      %707 = vmatprep.subr.mxu0 0.0
      %708 = vmatpush1.msra.mxu0 0.0
      %709 = vmatprep.subr.mxu0 0.0
      %710 = vmatpush1.msra.mxu0 0.0
      %711 = vmatprep.subr.mxu0 0.0
      %712 = vmatpush1.msra.mxu0 0.0
      %713 = vmatprep.subr.mxu0 0.0
      %714 = vmatpush1.msra.mxu0 0.0
      %715 = vmatprep.subr.mxu0 0.0
      %716 = vmatpush1.msra.mxu0 0.0
      %717 = vmatprep.subr.mxu0 0.0
      %718 = vmatpush1.msra.mxu0 0.0
      %719 = vmatprep.subr.mxu0 0.0
      %720 = vmatpush1.msra.mxu0 0.0
      %721 = vmatprep.subr.mxu0 0.0
      %722 = vmatpush1.msra.mxu0 0.0
      %723 = vmatprep.subr.mxu0 0.0
      %724 = vmatpush1.msra.mxu0 0.0
      %725 = vmatprep.subr.mxu0 0.0
      %726 = vmatpush1.msra.mxu0 0.0
      %727 = vmatprep.subr.mxu0 0.0
      %728 = vmatpush1.msra.mxu0 0.0
      %729 = vmatprep.subr.mxu0 0.0
      %730 = vmatpush1.msra.mxu0 %v697
      %731 = vmatprep.subr.mxu0 0.0
      %732 = vmatpush2.msra.mxu0 0.0
      %733 = vmatprep.subr.mxu0 0.0
      %734 = vmatpush2.msra.mxu0 0.0
      %735 = vmatprep.subr.mxu0 0.0
      %736 = vmatpush2.msra.mxu0 0.0
      %737 = vmatprep.subr.mxu0 0.0
      %738 = vmatpush2.msra.mxu0 0.0
      %739 = vmatprep.subr.mxu0 0.0
      %740 = vmatpush2.msra.mxu0 0.0
      %741 = vmatprep.subr.mxu0 0.0
      %742 = vmatpush2.msra.mxu0 0.0
      %743 = vmatprep.subr.mxu0 0.0
      %744 = vmatpush2.msra.mxu0 0.0
      %745 = vmatprep.subr.mxu0 0.0
      %746 = vmatpush2.msra.mxu0 0.0
      %747 = vmatprep.subr.mxu0 0.0
      %748 = vmatpush2.msra.mxu0 0.0
      %749 = vmatprep.subr.mxu0 0.0
      %750 = vmatpush2.msra.mxu0 0.0
      %751 = vmatprep.subr.mxu0 0.0
      %752 = vmatpush2.msra.mxu0 0.0
      %753 = vmatprep.subr.mxu0 0.0
      %754 = vmatpush2.msra.mxu0 0.0
      %755 = vmatprep.subr.mxu0 0.0
      %756 = vmatpush2.msra.mxu0 0.0
      %757 = vmatprep.subr.mxu0 0.0
      %758 = vmatpush2.msra.mxu0 0.0
      %759 = vmatprep.subr.mxu0 0.0
      %760 = vmatpush2.msra.mxu0 0.0
      %761 = vmatprep.subr.mxu0 0.0
      %762 = vmatpush2.msra.mxu0 0.0
      %763 = vmatprep.mubr.f32.mxu0 0.0
      %764 = vmatmul.mubr.f32.gmra.mxu0 %v312
      %v765 = vpop.f32.mrf.mxu0
      %v766 = vadd.f32 %v308, %v765
      %v767 = vpop.f32.mrf.mxu0
      %768 = vmatprep.mubr.f32.mxu0 0.0
      %769 = vmatmul.mubr.f32.gmra.mxu0 %v315
      %v770 = vpop.f32.mrf.mxu0
      %v771 = vadd.f32 %v308, %v770
      %v772 = vpop.f32.mrf.mxu0
      %773 = vmatprep.mubr.f32.mxu0 0.0
      %774 = vmatmul.mubr.f32.gmra.mxu0 %v318
      %v775 = vpop.f32.mrf.mxu0
      %v776 = vadd.f32 %v308, %v775
      %v777 = vpop.f32.mrf.mxu0
      %778 = vmatprep.mubr.f32.mxu0 0.0
      %779 = vmatmul.mubr.f32.gmra.mxu0 %v321
      %v780 = vpop.f32.mrf.mxu0
      %v781 = vadd.f32 %v308, %v780
      %v782 = vpop.f32.mrf.mxu0
      %783 = vmatprep.mubr.f32.mxu0 0.0
      %784 = vmatmul.mubr.f32.gmra.mxu0 %v324
      %v785 = vpop.f32.mrf.mxu0
      %v786 = vadd.f32 %v308, %v785
      %v787 = vpop.f32.mrf.mxu0
      %788 = vmatprep.mubr.f32.mxu0 0.0
      %789 = vmatmul.mubr.f32.gmra.mxu0 %v327
      %v790 = vpop.f32.mrf.mxu0
      %v791 = vadd.f32 %v308, %v790
      %v792 = vpop.f32.mrf.mxu0
      %793 = vmatprep.mubr.f32.mxu0 0.0
      %794 = vmatmul.mubr.f32.gmra.mxu0 %v330
      %v795 = vpop.f32.mrf.mxu0
      %v796 = vadd.f32 %v308, %v795
      %v797 = vpop.f32.mrf.mxu0
      %798 = vmatprep.mubr.f32.mxu0 0.0
      %799 = vmatmul.mubr.f32.gmra.mxu0 %v333
      %v800 = vpop.f32.mrf.mxu0
      %v801 = vadd.f32 %v308, %v800
      %v802 = vpop.f32.mrf.mxu0
      %803 = vmatprep.mubr.f32.mxu0 0.0
      %804 = vmatmul.mubr.f32.gmra.mxu0 %v336
      %v805 = vpop.f32.mrf.mxu0
      %v806 = vadd.f32 %v308, %v805
      %v807 = vpop.f32.mrf.mxu0
      %808 = vmatprep.mubr.f32.mxu0 0.0
      %809 = vmatmul.mubr.f32.gmra.mxu0 %v339
      %v810 = vpop.f32.mrf.mxu0
      %v811 = vadd.f32 %v308, %v810
      %v812 = vpop.f32.mrf.mxu0
      %813 = vmatprep.mubr.f32.mxu0 0.0
      %814 = vmatmul.mubr.f32.gmra.mxu0 %v342
      %v815 = vpop.f32.mrf.mxu0
      %v816 = vadd.f32 %v308, %v815
      %v817 = vpop.f32.mrf.mxu0
      %818 = vmatprep.mubr.f32.mxu0 0.0
      %819 = vmatmul.mubr.f32.gmra.mxu0 %v345
      %v820 = vpop.f32.mrf.mxu0
      %v821 = vadd.f32 %v308, %v820
      %v822 = vpop.f32.mrf.mxu0
      %823 = vmatprep.mubr.f32.mxu0 0.0
      %824 = vmatmul.mubr.f32.gmra.mxu0 %v348
      %v825 = vpop.f32.mrf.mxu0
      %v826 = vadd.f32 %v308, %v825
      %v827 = vpop.f32.mrf.mxu0
      %828 = vmatprep.mubr.f32.mxu0 0.0
      %829 = vmatmul.mubr.f32.gmra.mxu0 %v351
      %v830 = vpop.f32.mrf.mxu0
      %v831 = vadd.f32 %v308, %v830
      %v832 = vpop.f32.mrf.mxu0
      %833 = vmatprep.mubr.f32.mxu0 0.0
      %834 = vmatmul.mubr.f32.gmra.mxu0 %v354
      %v835 = vpop.f32.mrf.mxu0
      %v836 = vadd.f32 %v308, %v835
      %v837 = vpop.f32.mrf.mxu0
      %838 = vmatprep.mubr.f32.mxu0 0.0
      %839 = vmatmul.mubr.f32.gmra.mxu0 %v357
      %v840 = vpop.f32.mrf.mxu0
      %v841 = vadd.f32 %v308, %v840
      %v842 = vpop.f32.mrf.mxu0
      %843 = vmatprep.mubr.f32.mxu0 0.0
      %844 = vmatmul.mubr.f32.gmra.mxu0 %v360
      %v845 = vpop.f32.mrf.mxu0
      %v846 = vadd.f32 %v308, %v845
      %v847 = vpop.f32.mrf.mxu0
      %848 = vmatprep.mubr.f32.mxu0 0.0
      %849 = vmatmul.mubr.f32.gmra.mxu0 %v363
      %v850 = vpop.f32.mrf.mxu0
      %v851 = vadd.f32 %v308, %v850
      %v852 = vpop.f32.mrf.mxu0
      %853 = vmatprep.mubr.f32.mxu0 0.0
      %854 = vmatmul.mubr.f32.gmra.mxu0 %v366
      %v855 = vpop.f32.mrf.mxu0
      %v856 = vadd.f32 %v308, %v855
      %v857 = vpop.f32.mrf.mxu0
      %858 = vmatprep.mubr.f32.mxu0 0.0
      %859 = vmatmul.mubr.f32.gmra.mxu0 %v369
      %v860 = vpop.f32.mrf.mxu0
      %v861 = vadd.f32 %v308, %v860
      %v862 = vpop.f32.mrf.mxu0
      %863 = vmatprep.mubr.f32.mxu0 0.0
      %864 = vmatmul.mubr.f32.gmra.mxu0 %v372
      %v865 = vpop.f32.mrf.mxu0
      %v866 = vadd.f32 %v308, %v865
      %v867 = vpop.f32.mrf.mxu0
      %868 = vmatprep.mubr.f32.mxu0 0.0
      %869 = vmatmul.mubr.f32.gmra.mxu0 %v375
      %v870 = vpop.f32.mrf.mxu0
      %v871 = vadd.f32 %v308, %v870
      %v872 = vpop.f32.mrf.mxu0
      %873 = vmatprep.mubr.f32.mxu0 0.0
      %874 = vmatmul.mubr.f32.gmra.mxu0 %v378
      %v875 = vpop.f32.mrf.mxu0
      %v876 = vadd.f32 %v308, %v875
      %v877 = vpop.f32.mrf.mxu0
      %878 = vmatprep.mubr.f32.mxu0 0.0
      %879 = vmatmul.mubr.f32.gmra.mxu0 %v381
      %v880 = vpop.f32.mrf.mxu0
      %v881 = vadd.f32 %v308, %v880
      %v882 = vpop.f32.mrf.mxu0
      %883 = vmatprep.mubr.f32.mxu0 0.0
      %884 = vmatmul.mubr.f32.gmra.mxu0 %v384
      %v885 = vpop.f32.mrf.mxu0
      %v886 = vadd.f32 %v308, %v885
      %v887 = vpop.f32.mrf.mxu0
      %888 = vmatprep.mubr.f32.mxu0 0.0
      %889 = vmatmul.mubr.f32.gmra.mxu0 %v387
      %v890 = vpop.f32.mrf.mxu0
      %v891 = vadd.f32 %v308, %v890
      %v892 = vpop.f32.mrf.mxu0
      %893 = vmatprep.mubr.f32.mxu0 0.0
      %894 = vmatmul.mubr.f32.gmra.mxu0 %v390
      %v895 = vpop.f32.mrf.mxu0
      %v896 = vadd.f32 %v308, %v895
      %v897 = vpop.f32.mrf.mxu0
      %898 = vmatprep.mubr.f32.mxu0 0.0
      %899 = vmatmul.mubr.f32.gmra.mxu0 %v393
      %v900 = vpop.f32.mrf.mxu0
      %v901 = vadd.f32 %v308, %v900
      %v902 = vpop.f32.mrf.mxu0
      %903 = vmatprep.mubr.f32.mxu0 0.0
      %904 = vmatmul.mubr.f32.gmra.mxu0 %v396
      %v905 = vpop.f32.mrf.mxu0
      %v906 = vadd.f32 %v308, %v905
      %v907 = vpop.f32.mrf.mxu0
      %908 = vmatprep.mubr.f32.mxu0 0.0
      %909 = vmatmul.mubr.f32.gmra.mxu0 %v399
      %v910 = vpop.f32.mrf.mxu0
      %v911 = vadd.f32 %v308, %v910
      %v912 = vpop.f32.mrf.mxu0
      %913 = vmatprep.mubr.f32.mxu0 0.0
      %914 = vmatmul.mubr.f32.gmra.mxu0 %v402
      %v915 = vpop.f32.mrf.mxu0
      %v916 = vadd.f32 %v308, %v915
      %v917 = vpop.f32.mrf.mxu0
      %918 = vmatprep.mubr.f32.mxu0 0.0
      %919 = vmatmul.mubr.f32.gmra.mxu0 %v405
      %v920 = vpop.f32.mrf.mxu0
      %v921 = vadd.f32 %v308, %v920
      %v922 = vpop.f32.mrf.mxu0
      %923 = vmatprep.mubr.f32.mxu0 0.0
      %924 = vmatmul.mubr.f32.gmra.mxu0 %v408
      %v925 = vpop.f32.mrf.mxu0
      %v926 = vadd.f32 %v308, %v925
      %v927 = vpop.f32.mrf.mxu0
      %928 = vmatprep.mubr.f32.mxu0 0.0
      %929 = vmatmul.mubr.f32.gmra.mxu0 %v411
      %v930 = vpop.f32.mrf.mxu0
      %v931 = vadd.f32 %v308, %v930
      %v932 = vpop.f32.mrf.mxu0
      %933 = vmatprep.mubr.f32.mxu0 0.0
      %934 = vmatmul.mubr.f32.gmra.mxu0 %v414
      %v935 = vpop.f32.mrf.mxu0
      %v936 = vadd.f32 %v308, %v935
      %v937 = vpop.f32.mrf.mxu0
      %938 = vmatprep.mubr.f32.mxu0 0.0
      %939 = vmatmul.mubr.f32.gmra.mxu0 %v417
      %v940 = vpop.f32.mrf.mxu0
      %v941 = vadd.f32 %v308, %v940
      %v942 = vpop.f32.mrf.mxu0
      %943 = vmatprep.mubr.f32.mxu0 0.0
      %944 = vmatmul.mubr.f32.gmra.mxu0 %v420
      %v945 = vpop.f32.mrf.mxu0
      %v946 = vadd.f32 %v308, %v945
      %v947 = vpop.f32.mrf.mxu0
      %948 = vmatprep.mubr.f32.mxu0 0.0
      %949 = vmatmul.mubr.f32.gmra.mxu0 %v423
      %v950 = vpop.f32.mrf.mxu0
      %v951 = vadd.f32 %v308, %v950
      %v952 = vpop.f32.mrf.mxu0
      %953 = vmatprep.mubr.f32.mxu0 0.0
      %954 = vmatmul.mubr.f32.gmra.mxu0 %v426
      %v955 = vpop.f32.mrf.mxu0
      %v956 = vadd.f32 %v308, %v955
      %v957 = vpop.f32.mrf.mxu0
      %958 = vmatprep.mubr.f32.mxu0 0.0
      %959 = vmatmul.mubr.f32.gmra.mxu0 %v429
      %v960 = vpop.f32.mrf.mxu0
      %v961 = vadd.f32 %v308, %v960
      %v962 = vpop.f32.mrf.mxu0
      %963 = vmatprep.mubr.f32.mxu0 0.0
      %964 = vmatmul.mubr.f32.gmra.mxu0 %v432
      %v965 = vpop.f32.mrf.mxu0
      %v966 = vadd.f32 %v308, %v965
      %v967 = vpop.f32.mrf.mxu0
      %968 = vmatprep.mubr.f32.mxu0 0.0
      %969 = vmatmul.mubr.f32.gmra.mxu0 %v435
      %v970 = vpop.f32.mrf.mxu0
      %v971 = vadd.f32 %v308, %v970
      %v972 = vpop.f32.mrf.mxu0
      %973 = vmatprep.mubr.f32.mxu0 0.0
      %974 = vmatmul.mubr.f32.gmra.mxu0 %v438
      %v975 = vpop.f32.mrf.mxu0
      %v976 = vadd.f32 %v308, %v975
      %v977 = vpop.f32.mrf.mxu0
      %978 = vmatprep.mubr.f32.mxu0 0.0
      %979 = vmatmul.mubr.f32.gmra.mxu0 %v441
      %v980 = vpop.f32.mrf.mxu0
      %v981 = vadd.f32 %v308, %v980
      %v982 = vpop.f32.mrf.mxu0
      %983 = vmatprep.mubr.f32.mxu0 0.0
      %984 = vmatmul.mubr.f32.gmra.mxu0 %v444
      %v985 = vpop.f32.mrf.mxu0
      %v986 = vadd.f32 %v308, %v985
      %v987 = vpop.f32.mrf.mxu0
      %988 = vmatprep.mubr.f32.mxu0 0.0
      %989 = vmatmul.mubr.f32.gmra.mxu0 %v447
      %v990 = vpop.f32.mrf.mxu0
      %v991 = vadd.f32 %v308, %v990
      %v992 = vpop.f32.mrf.mxu0
      %993 = vmatprep.mubr.f32.mxu0 0.0
      %994 = vmatmul.mubr.f32.gmra.mxu0 %v450
      %v995 = vpop.f32.mrf.mxu0
      %v996 = vadd.f32 %v308, %v995
      %v997 = vpop.f32.mrf.mxu0
      %998 = vmatprep.mubr.f32.mxu0 0.0
      %999 = vmatmul.mubr.f32.gmra.mxu0 %v453
      %v1000 = vpop.f32.mrf.mxu0
      %v1001 = vadd.f32 %v308, %v1000
      %v1002 = vpop.f32.mrf.mxu0
      %1003 = vmatprep.mubr.f32.mxu0 0.0
      %1004 = vmatmul.mubr.f32.gmra.mxu0 %v456
      %v1005 = vpop.f32.mrf.mxu0
      %v1006 = vadd.f32 %v308, %v1005
      %v1007 = vpop.f32.mrf.mxu0
      %1008 = vmatprep.mubr.f32.mxu0 0.0
      %1009 = vmatmul.mubr.f32.gmra.mxu0 %v459
      %v1010 = vpop.f32.mrf.mxu0
      %v1011 = vadd.f32 %v308, %v1010
      %v1012 = vpop.f32.mrf.mxu0
      %1013 = vmatprep.mubr.f32.mxu0 0.0
      %1014 = vmatmul.mubr.f32.gmra.mxu0 %v462
      %v1015 = vpop.f32.mrf.mxu0
      %v1016 = vadd.f32 %v308, %v1015
      %v1017 = vpop.f32.mrf.mxu0
      %1018 = vmatprep.mubr.f32.mxu0 0.0
      %1019 = vmatmul.mubr.f32.gmra.mxu0 %v465
      %v1020 = vpop.f32.mrf.mxu0
      %v1021 = vadd.f32 %v308, %v1020
      %v1022 = vpop.f32.mrf.mxu0
      %1023 = vmatprep.mubr.f32.mxu0 0.0
      %1024 = vmatmul.mubr.f32.gmra.mxu0 %v468
      %v1025 = vpop.f32.mrf.mxu0
      %v1026 = vadd.f32 %v308, %v1025
      %v1027 = vpop.f32.mrf.mxu0
      %1028 = vmatprep.mubr.f32.mxu0 0.0
      %1029 = vmatmul.mubr.f32.gmra.mxu0 %v471
      %v1030 = vpop.f32.mrf.mxu0
      %v1031 = vadd.f32 %v308, %v1030
      %v1032 = vpop.f32.mrf.mxu0
      %1033 = vmatprep.mubr.f32.mxu0 0.0
      %1034 = vmatmul.mubr.f32.gmra.mxu0 %v474
      %v1035 = vpop.f32.mrf.mxu0
      %v1036 = vadd.f32 %v308, %v1035
      %v1037 = vpop.f32.mrf.mxu0
      %1038 = vmatprep.mubr.f32.mxu0 0.0
      %1039 = vmatmul.mubr.f32.gmra.mxu0 %v477
      %v1040 = vpop.f32.mrf.mxu0
      %v1041 = vadd.f32 %v308, %v1040
      %v1042 = vpop.f32.mrf.mxu0
      %1043 = vmatprep.mubr.f32.mxu0 0.0
      %1044 = vmatmul.mubr.f32.gmra.mxu0 %v480
      %v1045 = vpop.f32.mrf.mxu0
      %v1046 = vadd.f32 %v308, %v1045
      %v1047 = vpop.f32.mrf.mxu0
      %1048 = vmatprep.mubr.f32.mxu0 0.0
      %1049 = vmatmul.mubr.f32.gmra.mxu0 %v483
      %v1050 = vpop.f32.mrf.mxu0
      %v1051 = vadd.f32 %v308, %v1050
      %v1052 = vpop.f32.mrf.mxu0
      %1053 = vmatprep.mubr.f32.mxu0 0.0
      %1054 = vmatmul.mubr.f32.gmra.mxu0 %v486
      %v1055 = vpop.f32.mrf.mxu0
      %v1056 = vadd.f32 %v308, %v1055
      %v1057 = vpop.f32.mrf.mxu0
      %1058 = vmatprep.mubr.f32.mxu0 0.0
      %1059 = vmatmul.mubr.f32.gmra.mxu0 %v489
      %v1060 = vpop.f32.mrf.mxu0
      %v1061 = vadd.f32 %v308, %v1060
      %v1062 = vpop.f32.mrf.mxu0
      %1063 = vmatprep.mubr.f32.mxu0 0.0
      %1064 = vmatmul.mubr.f32.gmra.mxu0 %v492
      %v1065 = vpop.f32.mrf.mxu0
      %v1066 = vadd.f32 %v308, %v1065
      %v1067 = vpop.f32.mrf.mxu0
      %1068 = vmatprep.mubr.f32.mxu0 0.0
      %1069 = vmatmul.mubr.f32.gmra.mxu0 %v495
      %v1070 = vpop.f32.mrf.mxu0
      %v1071 = vadd.f32 %v308, %v1070
      %v1072 = vpop.f32.mrf.mxu0
      %1073 = vmatprep.mubr.f32.mxu0 0.0
      %1074 = vmatmul.mubr.f32.gmra.mxu0 %v498
      %v1075 = vpop.f32.mrf.mxu0
      %v1076 = vadd.f32 %v308, %v1075
      %v1077 = vpop.f32.mrf.mxu0
      %1078 = vmatprep.mubr.f32.mxu0 0.0
      %1079 = vmatmul.mubr.f32.gmra.mxu0 %v501
      %v1080 = vpop.f32.mrf.mxu0
      %v1081 = vadd.f32 %v308, %v1080
      %v1082 = vpop.f32.mrf.mxu0
      %1083 = vmatprep.mubr.f32.mxu0 0.0
      %1084 = vmatmul.mubr.f32.gmra.mxu0 %v504
      %v1085 = vpop.f32.mrf.mxu0
      %v1086 = vadd.f32 %v308, %v1085
      %v1087 = vpop.f32.mrf.mxu0
      %1088 = vmatprep.mubr.f32.mxu0 0.0
      %1089 = vmatmul.mubr.f32.gmra.mxu0 %v507
      %v1090 = vpop.f32.mrf.mxu0
      %v1091 = vadd.f32 %v308, %v1090
      %v1092 = vpop.f32.mrf.mxu0
      %1093 = vmatprep.mubr.f32.mxu0 0.0
      %1094 = vmatmul.mubr.f32.gmra.mxu0 %v510
      %v1095 = vpop.f32.mrf.mxu0
      %v1096 = vadd.f32 %v308, %v1095
      %v1097 = vpop.f32.mrf.mxu0
      %1098 = vmatprep.mubr.f32.mxu0 0.0
      %1099 = vmatmul.mubr.f32.gmra.mxu0 %v513
      %v1100 = vpop.f32.mrf.mxu0
      %v1101 = vadd.f32 %v308, %v1100
      %v1102 = vpop.f32.mrf.mxu0
      %1103 = vmatprep.mubr.f32.mxu0 0.0
      %1104 = vmatmul.mubr.f32.gmra.mxu0 %v516
      %v1105 = vpop.f32.mrf.mxu0
      %v1106 = vadd.f32 %v308, %v1105
      %v1107 = vpop.f32.mrf.mxu0
      %1108 = vmatprep.mubr.f32.mxu0 0.0
      %1109 = vmatmul.mubr.f32.gmra.mxu0 %v519
      %v1110 = vpop.f32.mrf.mxu0
      %v1111 = vadd.f32 %v308, %v1110
      %v1112 = vpop.f32.mrf.mxu0
      %1113 = vmatprep.mubr.f32.mxu0 0.0
      %1114 = vmatmul.mubr.f32.gmra.mxu0 %v522
      %v1115 = vpop.f32.mrf.mxu0
      %v1116 = vadd.f32 %v308, %v1115
      %v1117 = vpop.f32.mrf.mxu0
      %1118 = vmatprep.mubr.f32.mxu0 0.0
      %1119 = vmatmul.mubr.f32.gmra.mxu0 %v525
      %v1120 = vpop.f32.mrf.mxu0
      %v1121 = vadd.f32 %v308, %v1120
      %v1122 = vpop.f32.mrf.mxu0
      %1123 = vmatprep.mubr.f32.mxu0 0.0
      %1124 = vmatmul.mubr.f32.gmra.mxu0 %v528
      %v1125 = vpop.f32.mrf.mxu0
      %v1126 = vadd.f32 %v308, %v1125
      %v1127 = vpop.f32.mrf.mxu0
      %1128 = vmatprep.mubr.f32.mxu0 0.0
      %1129 = vmatmul.mubr.f32.gmra.mxu0 %v531
      %v1130 = vpop.f32.mrf.mxu0
      %v1131 = vadd.f32 %v308, %v1130
      %v1132 = vpop.f32.mrf.mxu0
      %1133 = vmatprep.mubr.f32.mxu0 0.0
      %1134 = vmatmul.mubr.f32.gmra.mxu0 %v534
      %v1135 = vpop.f32.mrf.mxu0
      %v1136 = vadd.f32 %v308, %v1135
      %v1137 = vpop.f32.mrf.mxu0
      %1138 = vmatprep.mubr.f32.mxu0 0.0
      %1139 = vmatmul.mubr.f32.gmra.mxu0 %v537
      %v1140 = vpop.f32.mrf.mxu0
      %v1141 = vadd.f32 %v308, %v1140
      %v1142 = vpop.f32.mrf.mxu0
      %1143 = vmatprep.mubr.f32.mxu0 0.0
      %1144 = vmatmul.mubr.f32.gmra.mxu0 %v540
      %v1145 = vpop.f32.mrf.mxu0
      %v1146 = vadd.f32 %v308, %v1145
      %v1147 = vpop.f32.mrf.mxu0
      %1148 = vmatprep.mubr.f32.mxu0 0.0
      %1149 = vmatmul.mubr.f32.gmra.mxu0 %v543
      %v1150 = vpop.f32.mrf.mxu0
      %v1151 = vadd.f32 %v308, %v1150
      %v1152 = vpop.f32.mrf.mxu0
      %1153 = vmatprep.mubr.f32.mxu0 0.0
      %1154 = vmatmul.mubr.f32.gmra.mxu0 %v546
      %v1155 = vpop.f32.mrf.mxu0
      %v1156 = vadd.f32 %v308, %v1155
      %v1157 = vpop.f32.mrf.mxu0
      %1158 = vmatprep.mubr.f32.mxu0 0.0
      %1159 = vmatmul.mubr.f32.gmra.mxu0 %v549
      %v1160 = vpop.f32.mrf.mxu0
      %v1161 = vadd.f32 %v308, %v1160
      %v1162 = vpop.f32.mrf.mxu0
      %1163 = vmatprep.mubr.f32.mxu0 0.0
      %1164 = vmatmul.mubr.f32.gmra.mxu0 %v552
      %v1165 = vpop.f32.mrf.mxu0
      %v1166 = vadd.f32 %v308, %v1165
      %v1167 = vpop.f32.mrf.mxu0
      %1168 = vmatprep.mubr.f32.mxu0 0.0
      %1169 = vmatmul.mubr.f32.gmra.mxu0 %v555
      %v1170 = vpop.f32.mrf.mxu0
      %v1171 = vadd.f32 %v308, %v1170
      %v1172 = vpop.f32.mrf.mxu0
      %1173 = vmatprep.mubr.f32.mxu0 0.0
      %1174 = vmatmul.mubr.f32.gmra.mxu0 %v558
      %v1175 = vpop.f32.mrf.mxu0
      %v1176 = vadd.f32 %v308, %v1175
      %v1177 = vpop.f32.mrf.mxu0
      %1178 = vmatprep.mubr.f32.mxu0 0.0
      %1179 = vmatmul.mubr.f32.gmra.mxu0 %v561
      %v1180 = vpop.f32.mrf.mxu0
      %v1181 = vadd.f32 %v308, %v1180
      %v1182 = vpop.f32.mrf.mxu0
      %1183 = vmatprep.mubr.f32.mxu0 0.0
      %1184 = vmatmul.mubr.f32.gmra.mxu0 %v564
      %v1185 = vpop.f32.mrf.mxu0
      %v1186 = vadd.f32 %v308, %v1185
      %v1187 = vpop.f32.mrf.mxu0
      %1188 = vmatprep.mubr.f32.mxu0 0.0
      %1189 = vmatmul.mubr.f32.gmra.mxu0 %v567
      %v1190 = vpop.f32.mrf.mxu0
      %v1191 = vadd.f32 %v308, %v1190
      %v1192 = vpop.f32.mrf.mxu0
      %1193 = vmatprep.mubr.f32.mxu0 0.0
      %1194 = vmatmul.mubr.f32.gmra.mxu0 %v570
      %v1195 = vpop.f32.mrf.mxu0
      %v1196 = vadd.f32 %v308, %v1195
      %v1197 = vpop.f32.mrf.mxu0
      %1198 = vmatprep.mubr.f32.mxu0 0.0
      %1199 = vmatmul.mubr.f32.gmra.mxu0 %v573
      %v1200 = vpop.f32.mrf.mxu0
      %v1201 = vadd.f32 %v308, %v1200
      %v1202 = vpop.f32.mrf.mxu0
      %1203 = vmatprep.mubr.f32.mxu0 0.0
      %1204 = vmatmul.mubr.f32.gmra.mxu0 %v576
      %v1205 = vpop.f32.mrf.mxu0
      %v1206 = vadd.f32 %v308, %v1205
      %v1207 = vpop.f32.mrf.mxu0
      %1208 = vmatprep.mubr.f32.mxu0 0.0
      %1209 = vmatmul.mubr.f32.gmra.mxu0 %v579
      %v1210 = vpop.f32.mrf.mxu0
      %v1211 = vadd.f32 %v308, %v1210
      %v1212 = vpop.f32.mrf.mxu0
      %1213 = vmatprep.mubr.f32.mxu0 0.0
      %1214 = vmatmul.mubr.f32.gmra.mxu0 %v582
      %v1215 = vpop.f32.mrf.mxu0
      %v1216 = vadd.f32 %v308, %v1215
      %v1217 = vpop.f32.mrf.mxu0
      %1218 = vmatprep.mubr.f32.mxu0 0.0
      %1219 = vmatmul.mubr.f32.gmra.mxu0 %v585
      %v1220 = vpop.f32.mrf.mxu0
      %v1221 = vadd.f32 %v308, %v1220
      %v1222 = vpop.f32.mrf.mxu0
      %1223 = vmatprep.mubr.f32.mxu0 0.0
      %1224 = vmatmul.mubr.f32.gmra.mxu0 %v588
      %v1225 = vpop.f32.mrf.mxu0
      %v1226 = vadd.f32 %v308, %v1225
      %v1227 = vpop.f32.mrf.mxu0
      %1228 = vmatprep.mubr.f32.mxu0 0.0
      %1229 = vmatmul.mubr.f32.gmra.mxu0 %v591
      %v1230 = vpop.f32.mrf.mxu0
      %v1231 = vadd.f32 %v308, %v1230
      %v1232 = vpop.f32.mrf.mxu0
      %1233 = vmatprep.mubr.f32.mxu0 0.0
      %1234 = vmatmul.mubr.f32.gmra.mxu0 %v594
      %v1235 = vpop.f32.mrf.mxu0
      %v1236 = vadd.f32 %v308, %v1235
      %v1237 = vpop.f32.mrf.mxu0
      %1238 = vmatprep.mubr.f32.mxu0 0.0
      %1239 = vmatmul.mubr.f32.gmra.mxu0 %v597
      %v1240 = vpop.f32.mrf.mxu0
      %v1241 = vadd.f32 %v308, %v1240
      %v1242 = vpop.f32.mrf.mxu0
      %1243 = vmatprep.mubr.f32.mxu0 0.0
      %1244 = vmatmul.mubr.f32.gmra.mxu0 %v600
      %v1245 = vpop.f32.mrf.mxu0
      %v1246 = vadd.f32 %v308, %v1245
      %v1247 = vpop.f32.mrf.mxu0
      %1248 = vmatprep.mubr.f32.mxu0 0.0
      %1249 = vmatmul.mubr.f32.gmra.mxu0 %v603
      %v1250 = vpop.f32.mrf.mxu0
      %v1251 = vadd.f32 %v308, %v1250
      %v1252 = vpop.f32.mrf.mxu0
      %1253 = vmatprep.mubr.f32.mxu0 0.0
      %1254 = vmatmul.mubr.f32.gmra.mxu0 %v606
      %v1255 = vpop.f32.mrf.mxu0
      %v1256 = vadd.f32 %v308, %v1255
      %v1257 = vpop.f32.mrf.mxu0
      %1258 = vmatprep.mubr.f32.mxu0 0.0
      %1259 = vmatmul.mubr.f32.gmra.mxu0 %v609
      %v1260 = vpop.f32.mrf.mxu0
      %v1261 = vadd.f32 %v308, %v1260
      %v1262 = vpop.f32.mrf.mxu0
      %1263 = vmatprep.mubr.f32.mxu0 0.0
      %1264 = vmatmul.mubr.f32.gmra.mxu0 %v612
      %v1265 = vpop.f32.mrf.mxu0
      %v1266 = vadd.f32 %v308, %v1265
      %v1267 = vpop.f32.mrf.mxu0
      %1268 = vmatprep.mubr.f32.mxu0 0.0
      %1269 = vmatmul.mubr.f32.gmra.mxu0 %v615
      %v1270 = vpop.f32.mrf.mxu0
      %v1271 = vadd.f32 %v308, %v1270
      %v1272 = vpop.f32.mrf.mxu0
      %1273 = vmatprep.mubr.f32.mxu0 0.0
      %1274 = vmatmul.mubr.f32.gmra.mxu0 %v618
      %v1275 = vpop.f32.mrf.mxu0
      %v1276 = vadd.f32 %v308, %v1275
      %v1277 = vpop.f32.mrf.mxu0
      %1278 = vmatprep.mubr.f32.mxu0 0.0
      %1279 = vmatmul.mubr.f32.gmra.mxu0 %v621
      %v1280 = vpop.f32.mrf.mxu0
      %v1281 = vadd.f32 %v308, %v1280
      %v1282 = vpop.f32.mrf.mxu0
      %1283 = vmatprep.mubr.f32.mxu0 0.0
      %1284 = vmatmul.mubr.f32.gmra.mxu0 %v624
      %v1285 = vpop.f32.mrf.mxu0
      %v1286 = vadd.f32 %v308, %v1285
      %v1287 = vpop.f32.mrf.mxu0
      %1288 = vmatprep.mubr.f32.mxu0 0.0
      %1289 = vmatmul.mubr.f32.gmra.mxu0 %v627
      %v1290 = vpop.f32.mrf.mxu0
      %v1291 = vadd.f32 %v308, %v1290
      %v1292 = vpop.f32.mrf.mxu0
      %1293 = vmatprep.mubr.f32.mxu0 0.0
      %1294 = vmatmul.mubr.f32.gmra.mxu0 %v630
      %v1295 = vpop.f32.mrf.mxu0
      %v1296 = vadd.f32 %v308, %v1295
      %v1297 = vpop.f32.mrf.mxu0
      %1298 = vmatprep.mubr.f32.mxu0 0.0
      %1299 = vmatmul.mubr.f32.gmra.mxu0 %v633
      %v1300 = vpop.f32.mrf.mxu0
      %v1301 = vadd.f32 %v308, %v1300
      %v1302 = vpop.f32.mrf.mxu0
      %1303 = vmatprep.mubr.f32.mxu0 0.0
      %1304 = vmatmul.mubr.f32.gmra.mxu0 %v636
      %v1305 = vpop.f32.mrf.mxu0
      %v1306 = vadd.f32 %v308, %v1305
      %v1307 = vpop.f32.mrf.mxu0
      %1308 = vmatprep.mubr.f32.mxu0 0.0
      %1309 = vmatmul.mubr.f32.gmra.mxu0 %v639
      %v1310 = vpop.f32.mrf.mxu0
      %v1311 = vadd.f32 %v308, %v1310
      %v1312 = vpop.f32.mrf.mxu0
      %1313 = vmatprep.mubr.f32.mxu0 0.0
      %1314 = vmatmul.mubr.f32.gmra.mxu0 %v642
      %v1315 = vpop.f32.mrf.mxu0
      %v1316 = vadd.f32 %v308, %v1315
      %v1317 = vpop.f32.mrf.mxu0
      %1318 = vmatprep.mubr.f32.mxu0 0.0
      %1319 = vmatmul.mubr.f32.gmra.mxu0 %v645
      %v1320 = vpop.f32.mrf.mxu0
      %v1321 = vadd.f32 %v308, %v1320
      %v1322 = vpop.f32.mrf.mxu0
      %1323 = vmatprep.mubr.f32.mxu0 0.0
      %1324 = vmatmul.mubr.f32.gmra.mxu0 %v648
      %v1325 = vpop.f32.mrf.mxu0
      %v1326 = vadd.f32 %v308, %v1325
      %v1327 = vpop.f32.mrf.mxu0
      %1328 = vmatprep.mubr.f32.mxu0 0.0
      %1329 = vmatmul.mubr.f32.gmra.mxu0 %v651
      %v1330 = vpop.f32.mrf.mxu0
      %v1331 = vadd.f32 %v308, %v1330
      %v1332 = vpop.f32.mrf.mxu0
      %1333 = vmatprep.mubr.f32.mxu0 0.0
      %1334 = vmatmul.mubr.f32.gmra.mxu0 %v654
      %v1335 = vpop.f32.mrf.mxu0
      %v1336 = vadd.f32 %v308, %v1335
      %v1337 = vpop.f32.mrf.mxu0
      %1338 = vmatprep.mubr.f32.mxu0 0.0
      %1339 = vmatmul.mubr.f32.gmra.mxu0 %v657
      %v1340 = vpop.f32.mrf.mxu0
      %v1341 = vadd.f32 %v308, %v1340
      %v1342 = vpop.f32.mrf.mxu0
      %1343 = vmatprep.mubr.f32.mxu0 0.0
      %1344 = vmatmul.mubr.f32.gmra.mxu0 %v660
      %v1345 = vpop.f32.mrf.mxu0
      %v1346 = vadd.f32 %v308, %v1345
      %v1347 = vpop.f32.mrf.mxu0
      %1348 = vmatprep.mubr.f32.mxu0 0.0
      %1349 = vmatmul.mubr.f32.gmra.mxu0 %v663
      %v1350 = vpop.f32.mrf.mxu0
      %v1351 = vadd.f32 %v308, %v1350
      %v1352 = vpop.f32.mrf.mxu0
      %1353 = vmatprep.mubr.f32.mxu0 0.0
      %1354 = vmatmul.mubr.f32.gmra.mxu0 %v666
      %v1355 = vpop.f32.mrf.mxu0
      %v1356 = vadd.f32 %v308, %v1355
      %v1357 = vpop.f32.mrf.mxu0
      %1358 = vmatprep.mubr.f32.mxu0 0.0
      %1359 = vmatmul.mubr.f32.gmra.mxu0 %v669
      %v1360 = vpop.f32.mrf.mxu0
      %v1361 = vadd.f32 %v308, %v1360
      %v1362 = vpop.f32.mrf.mxu0
      %1363 = vmatprep.mubr.f32.mxu0 0.0
      %1364 = vmatmul.mubr.f32.gmra.mxu0 %v672
      %v1365 = vpop.f32.mrf.mxu0
      %v1366 = vadd.f32 %v308, %v1365
      %v1367 = vpop.f32.mrf.mxu0
      %1368 = vmatprep.mubr.f32.mxu0 0.0
      %1369 = vmatmul.mubr.f32.gmra.mxu0 %v675
      %v1370 = vpop.f32.mrf.mxu0
      %v1371 = vadd.f32 %v308, %v1370
      %v1372 = vpop.f32.mrf.mxu0
      %1373 = vmatprep.mubr.f32.mxu0 0.0
      %1374 = vmatmul.mubr.f32.gmra.mxu0 %v678
      %v1375 = vpop.f32.mrf.mxu0
      %v1376 = vadd.f32 %v308, %v1375
      %v1377 = vpop.f32.mrf.mxu0
      %1378 = vmatprep.mubr.f32.mxu0 0.0
      %1379 = vmatmul.mubr.f32.gmra.mxu0 %v681
      %v1380 = vpop.f32.mrf.mxu0
      %v1381 = vadd.f32 %v308, %v1380
      %v1382 = vpop.f32.mrf.mxu0
      %1383 = vmatprep.mubr.f32.mxu0 0.0
      %1384 = vmatmul.mubr.f32.gmra.mxu0 %v684
      %v1385 = vpop.f32.mrf.mxu0
      %v1386 = vadd.f32 %v308, %v1385
      %v1387 = vpop.f32.mrf.mxu0
      %1388 = vmatprep.mubr.f32.mxu0 0.0
      %1389 = vmatmul.mubr.f32.gmra.mxu0 %v687
      %v1390 = vpop.f32.mrf.mxu0
      %v1391 = vadd.f32 %v308, %v1390
      %v1392 = vpop.f32.mrf.mxu0
      %1393 = vmatprep.mubr.f32.mxu0 0.0
      %1394 = vmatmul.mubr.f32.gmra.mxu0 %v690
      %v1395 = vpop.f32.mrf.mxu0
      %v1396 = vadd.f32 %v308, %v1395
      %v1397 = vpop.f32.mrf.mxu0
      %1398 = vmatprep.mubr.f32.mxu0 0.0
      %1399 = vmatmul.mubr.f32.gmra.mxu0 %v693
      %v1400 = vpop.f32.mrf.mxu0
      %v1401 = vadd.f32 %v308, %v1400
      %v1402 = vpop.f32.mrf.mxu0
      %1403 = vdwg.mxu0
      %vm1404 = vcmask 64512
      %1405 = vst.msk [vmem:[%s172] sm:$0xff] %vm1404, %v766
      %1406 = vst.msk [vmem:[%s172 + $0x8] sm:$0xff] %vm1404, %v771
      %1407 = vst.msk [vmem:[%s172 + $0x10] sm:$0xff] %vm1404, %v776
      %1408 = vst.msk [vmem:[%s172 + $0x18] sm:$0xff] %vm1404, %v781
      %1409 = vst.msk [vmem:[%s172 + $0x20] sm:$0xff] %vm1404, %v786
      %1410 = vst.msk [vmem:[%s172 + $0x28] sm:$0xff] %vm1404, %v791
      %1411 = vst.msk [vmem:[%s172 + $0x30] sm:$0xff] %vm1404, %v796
      %1412 = vst.msk [vmem:[%s172 + $0x38] sm:$0xff] %vm1404, %v801
      %1413 = vst.msk [vmem:[%s172 + $0x40] sm:$0xff] %vm1404, %v806
      %1414 = vst.msk [vmem:[%s172 + $0x48] sm:$0xff] %vm1404, %v811
      %1415 = vst.msk [vmem:[%s172 + $0x50] sm:$0xff] %vm1404, %v816
      %1416 = vst.msk [vmem:[%s172 + $0x58] sm:$0xff] %vm1404, %v821
      %1417 = vst.msk [vmem:[%s172 + $0x60] sm:$0xff] %vm1404, %v826
      %1418 = vst.msk [vmem:[%s172 + $0x68] sm:$0xff] %vm1404, %v831
      %1419 = vst.msk [vmem:[%s172 + $0x70] sm:$0xff] %vm1404, %v836
      %1420 = vst.msk [vmem:[%s172 + $0x78] sm:$0xff] %vm1404, %v841
      %1421 = vst.msk [vmem:[%s172 + $0x80] sm:$0xff] %vm1404, %v846
      %1422 = vst.msk [vmem:[%s172 + $0x88] sm:$0xff] %vm1404, %v851
      %1423 = vst.msk [vmem:[%s172 + $0x90] sm:$0xff] %vm1404, %v856
      %1424 = vst.msk [vmem:[%s172 + $0x98] sm:$0xff] %vm1404, %v861
      %1425 = vst.msk [vmem:[%s172 + $0xa0] sm:$0xff] %vm1404, %v866
      %1426 = vst.msk [vmem:[%s172 + $0xa8] sm:$0xff] %vm1404, %v871
      %1427 = vst.msk [vmem:[%s172 + $0xb0] sm:$0xff] %vm1404, %v876
      %1428 = vst.msk [vmem:[%s172 + $0xb8] sm:$0xff] %vm1404, %v881
      %1429 = vst.msk [vmem:[%s172 + $0xc0] sm:$0xff] %vm1404, %v886
      %1430 = vst.msk [vmem:[%s172 + $0xc8] sm:$0xff] %vm1404, %v891
      %1431 = vst.msk [vmem:[%s172 + $0xd0] sm:$0xff] %vm1404, %v896
      %1432 = vst.msk [vmem:[%s172 + $0xd8] sm:$0xff] %vm1404, %v901
      %1433 = vst.msk [vmem:[%s172 + $0xe0] sm:$0xff] %vm1404, %v906
      %1434 = vst.msk [vmem:[%s172 + $0xe8] sm:$0xff] %vm1404, %v911
      %1435 = vst.msk [vmem:[%s172 + $0xf0] sm:$0xff] %vm1404, %v916
      %1436 = vst.msk [vmem:[%s172 + $0xf8] sm:$0xff] %vm1404, %v921
      %1437 = vst.msk [vmem:[%s172 + $0x100] sm:$0xff] %vm1404, %v926
      %1438 = vst.msk [vmem:[%s172 + $0x108] sm:$0xff] %vm1404, %v931
      %1439 = vst.msk [vmem:[%s172 + $0x110] sm:$0xff] %vm1404, %v936
      %1440 = vst.msk [vmem:[%s172 + $0x118] sm:$0xff] %vm1404, %v941
      %1441 = vst.msk [vmem:[%s172 + $0x120] sm:$0xff] %vm1404, %v946
      %1442 = vst.msk [vmem:[%s172 + $0x128] sm:$0xff] %vm1404, %v951
      %1443 = vst.msk [vmem:[%s172 + $0x130] sm:$0xff] %vm1404, %v956
      %1444 = vst.msk [vmem:[%s172 + $0x138] sm:$0xff] %vm1404, %v961
      %1445 = vst.msk [vmem:[%s172 + $0x140] sm:$0xff] %vm1404, %v966
      %1446 = vst.msk [vmem:[%s172 + $0x148] sm:$0xff] %vm1404, %v971
      %1447 = vst.msk [vmem:[%s172 + $0x150] sm:$0xff] %vm1404, %v976
      %1448 = vst.msk [vmem:[%s172 + $0x158] sm:$0xff] %vm1404, %v981
      %1449 = vst.msk [vmem:[%s172 + $0x160] sm:$0xff] %vm1404, %v986
      %1450 = vst.msk [vmem:[%s172 + $0x168] sm:$0xff] %vm1404, %v991
      %1451 = vst.msk [vmem:[%s172 + $0x170] sm:$0xff] %vm1404, %v996
      %1452 = vst.msk [vmem:[%s172 + $0x178] sm:$0xff] %vm1404, %v1001
      %1453 = vst.msk [vmem:[%s172 + $0x180] sm:$0xff] %vm1404, %v1006
      %1454 = vst.msk [vmem:[%s172 + $0x188] sm:$0xff] %vm1404, %v1011
      %1455 = vst.msk [vmem:[%s172 + $0x190] sm:$0xff] %vm1404, %v1016
      %1456 = vst.msk [vmem:[%s172 + $0x198] sm:$0xff] %vm1404, %v1021
      %1457 = vst.msk [vmem:[%s172 + $0x1a0] sm:$0xff] %vm1404, %v1026
      %1458 = vst.msk [vmem:[%s172 + $0x1a8] sm:$0xff] %vm1404, %v1031
      %1459 = vst.msk [vmem:[%s172 + $0x1b0] sm:$0xff] %vm1404, %v1036
      %1460 = vst.msk [vmem:[%s172 + $0x1b8] sm:$0xff] %vm1404, %v1041
      %1461 = vst.msk [vmem:[%s172 + $0x1c0] sm:$0xff] %vm1404, %v1046
      %1462 = vst.msk [vmem:[%s172 + $0x1c8] sm:$0xff] %vm1404, %v1051
      %1463 = vst.msk [vmem:[%s172 + $0x1d0] sm:$0xff] %vm1404, %v1056
      %1464 = vst.msk [vmem:[%s172 + $0x1d8] sm:$0xff] %vm1404, %v1061
      %1465 = vst.msk [vmem:[%s172 + $0x1e0] sm:$0xff] %vm1404, %v1066
      %1466 = vst.msk [vmem:[%s172 + $0x1e8] sm:$0xff] %vm1404, %v1071
      %1467 = vst.msk [vmem:[%s172 + $0x1f0] sm:$0xff] %vm1404, %v1076
      %1468 = vst.msk [vmem:[%s172 + $0x1f8] sm:$0xff] %vm1404, %v1081
      %1469 = vst.msk [vmem:[%s172 + $0x200] sm:$0xff] %vm1404, %v1086
      %1470 = vst.msk [vmem:[%s172 + $0x208] sm:$0xff] %vm1404, %v1091
      %1471 = vst.msk [vmem:[%s172 + $0x210] sm:$0xff] %vm1404, %v1096
      %1472 = vst.msk [vmem:[%s172 + $0x218] sm:$0xff] %vm1404, %v1101
      %1473 = vst.msk [vmem:[%s172 + $0x220] sm:$0xff] %vm1404, %v1106
      %1474 = vst.msk [vmem:[%s172 + $0x228] sm:$0xff] %vm1404, %v1111
      %1475 = vst.msk [vmem:[%s172 + $0x230] sm:$0xff] %vm1404, %v1116
      %1476 = vst.msk [vmem:[%s172 + $0x238] sm:$0xff] %vm1404, %v1121
      %1477 = vst.msk [vmem:[%s172 + $0x240] sm:$0xff] %vm1404, %v1126
      %1478 = vst.msk [vmem:[%s172 + $0x248] sm:$0xff] %vm1404, %v1131
      %1479 = vst.msk [vmem:[%s172 + $0x250] sm:$0xff] %vm1404, %v1136
      %1480 = vst.msk [vmem:[%s172 + $0x258] sm:$0xff] %vm1404, %v1141
      %1481 = vst.msk [vmem:[%s172 + $0x260] sm:$0xff] %vm1404, %v1146
      %1482 = vst.msk [vmem:[%s172 + $0x268] sm:$0xff] %vm1404, %v1151
      %1483 = vst.msk [vmem:[%s172 + $0x270] sm:$0xff] %vm1404, %v1156
      %1484 = vst.msk [vmem:[%s172 + $0x278] sm:$0xff] %vm1404, %v1161
      %1485 = vst.msk [vmem:[%s172 + $0x280] sm:$0xff] %vm1404, %v1166
      %1486 = vst.msk [vmem:[%s172 + $0x288] sm:$0xff] %vm1404, %v1171
      %1487 = vst.msk [vmem:[%s172 + $0x290] sm:$0xff] %vm1404, %v1176
      %1488 = vst.msk [vmem:[%s172 + $0x298] sm:$0xff] %vm1404, %v1181
      %1489 = vst.msk [vmem:[%s172 + $0x2a0] sm:$0xff] %vm1404, %v1186
      %1490 = vst.msk [vmem:[%s172 + $0x2a8] sm:$0xff] %vm1404, %v1191
      %1491 = vst.msk [vmem:[%s172 + $0x2b0] sm:$0xff] %vm1404, %v1196
      %1492 = vst.msk [vmem:[%s172 + $0x2b8] sm:$0xff] %vm1404, %v1201
      %1493 = vst.msk [vmem:[%s172 + $0x2c0] sm:$0xff] %vm1404, %v1206
      %1494 = vst.msk [vmem:[%s172 + $0x2c8] sm:$0xff] %vm1404, %v1211
      %1495 = vst.msk [vmem:[%s172 + $0x2d0] sm:$0xff] %vm1404, %v1216
      %1496 = vst.msk [vmem:[%s172 + $0x2d8] sm:$0xff] %vm1404, %v1221
      %1497 = vst.msk [vmem:[%s172 + $0x2e0] sm:$0xff] %vm1404, %v1226
      %1498 = vst.msk [vmem:[%s172 + $0x2e8] sm:$0xff] %vm1404, %v1231
      %1499 = vst.msk [vmem:[%s172 + $0x2f0] sm:$0xff] %vm1404, %v1236
      %1500 = vst.msk [vmem:[%s172 + $0x2f8] sm:$0xff] %vm1404, %v1241
      %1501 = vst.msk [vmem:[%s172 + $0x300] sm:$0xff] %vm1404, %v1246
      %1502 = vst.msk [vmem:[%s172 + $0x308] sm:$0xff] %vm1404, %v1251
      %1503 = vst.msk [vmem:[%s172 + $0x310] sm:$0xff] %vm1404, %v1256
      %1504 = vst.msk [vmem:[%s172 + $0x318] sm:$0xff] %vm1404, %v1261
      %1505 = vst.msk [vmem:[%s172 + $0x320] sm:$0xff] %vm1404, %v1266
      %1506 = vst.msk [vmem:[%s172 + $0x328] sm:$0xff] %vm1404, %v1271
      %1507 = vst.msk [vmem:[%s172 + $0x330] sm:$0xff] %vm1404, %v1276
      %1508 = vst.msk [vmem:[%s172 + $0x338] sm:$0xff] %vm1404, %v1281
      %1509 = vst.msk [vmem:[%s172 + $0x340] sm:$0xff] %vm1404, %v1286
      %1510 = vst.msk [vmem:[%s172 + $0x348] sm:$0xff] %vm1404, %v1291
      %1511 = vst.msk [vmem:[%s172 + $0x350] sm:$0xff] %vm1404, %v1296
      %1512 = vst.msk [vmem:[%s172 + $0x358] sm:$0xff] %vm1404, %v1301
      %1513 = vst.msk [vmem:[%s172 + $0x360] sm:$0xff] %vm1404, %v1306
      %1514 = vst.msk [vmem:[%s172 + $0x368] sm:$0xff] %vm1404, %v1311
      %1515 = vst.msk [vmem:[%s172 + $0x370] sm:$0xff] %vm1404, %v1316
      %1516 = vst.msk [vmem:[%s172 + $0x378] sm:$0xff] %vm1404, %v1321
      %1517 = vst.msk [vmem:[%s172 + $0x380] sm:$0xff] %vm1404, %v1326
      %1518 = vst.msk [vmem:[%s172 + $0x388] sm:$0xff] %vm1404, %v1331
      %1519 = vst.msk [vmem:[%s172 + $0x390] sm:$0xff] %vm1404, %v1336
      %1520 = vst.msk [vmem:[%s172 + $0x398] sm:$0xff] %vm1404, %v1341
      %1521 = vst.msk [vmem:[%s172 + $0x3a0] sm:$0xff] %vm1404, %v1346
      %1522 = vst.msk [vmem:[%s172 + $0x3a8] sm:$0xff] %vm1404, %v1351
      %1523 = vst.msk [vmem:[%s172 + $0x3b0] sm:$0xff] %vm1404, %v1356
      %1524 = vst.msk [vmem:[%s172 + $0x3b8] sm:$0xff] %vm1404, %v1361
      %1525 = vst.msk [vmem:[%s172 + $0x3c0] sm:$0xff] %vm1404, %v1366
      %1526 = vst.msk [vmem:[%s172 + $0x3c8] sm:$0xff] %vm1404, %v1371
      %1527 = vst.msk [vmem:[%s172 + $0x3d0] sm:$0xff] %vm1404, %v1376
      %1528 = vst.msk [vmem:[%s172 + $0x3d8] sm:$0xff] %vm1404, %v1381
      %1529 = vst.msk [vmem:[%s172 + $0x3e0] sm:$0xff] %vm1404, %v1386
      %1530 = vst.msk [vmem:[%s172 + $0x3e8] sm:$0xff] %vm1404, %v1391
      %1531 = vst.msk [vmem:[%s172 + $0x3f0] sm:$0xff] %vm1404, %v1396
      %1532 = vst.msk [vmem:[%s172 + $0x3f8] sm:$0xff] %vm1404, %v1401
      %s1533 = smul.u32 128, %s14
      %p1534 = scmp.lt.s32.totalorder %s1533, 255
      %s1535 = scalar_select %p1534, %s1533, 255
      %s1536 = smul.addr %s1535, 8
      %s1537 = scalar_lea.vmem %s3, %s1536
      // Predicated region
      $region33: #{tpu_custom_call.1} parent=31 // pred_check
        %p1538 = pneg %p100
      $region34: #{tpu_custom_call.1} parent=31 // pred_check_branch
        %1540 = sbr.rel (%p1538) target = $region36
      $region35: #{tpu_custom_call.1} parent=31 // pred_region
        %s1541 = smul.u32 128, %s14
      $region36: #{tpu_custom_call.1} parent=31 // pred_fallthru
        _
    $region32: #{tpu_custom_call.1} parent=5 // pred_fallthru
      _
    %p1542 = scmp.le.s32.totalorder 2, %s9
    // Predicated region
    $region37: #{tpu_custom_call.1} parent=5 // pred_check
      %p1543 = pneg %p1542
    $region38: #{tpu_custom_call.1} parent=5 // pred_check_branch
      %1545 = sbr.rel (%p1543) target = $region40
    $region39: #{tpu_custom_call.1} parent=5 // pred_region
      %s1546 = ssub.s32 %s9, 2
      // Predicated region
      $region41: #{tpu_custom_call.1} parent=39 // pred_check
        %p1547 = pneg %p106
      $region42: #{tpu_custom_call.1} parent=39 // pred_check_branch
        %1549 = sbr.rel (%p1547) target = $region44
      $region43: #{tpu_custom_call.1} parent=39 // pred_region
        %s1550 = smul.u32 128, %s15
        %p1551 = scmp.lt.s32.totalorder %s1550, 255
        %s1552 = scalar_select %p1551, %s1550, 255
        %s1553 = smul.addr %s1552, 8
        %s1554 = scalar_lea.vmem %s3, %s1553
      $region44: #{tpu_custom_call.1} parent=39 // pred_fallthru
        _
    $region40: #{tpu_custom_call.1} parent=5 // pred_fallthru
      _
  $region6: #{tpu_custom_call.1} parent=0 // loop_footer
    %s13 = sadd.s32 1, %s9
  $region7: #{tpu_custom_call.1} parent=0 // loop_footer_branch
    %8 = sbr.rel target = $region3
  $region8: #{tpu_custom_call.1} parent=0 // loop_exit
    _

</llo_original>
